<compile_context>
chip_gen: v5e
topology: v5e:2x2
jax: 0.10.0
libtpu: 0.0.40
codegen_flags: <defaults>
</compile_context>

<pallas_src>
import jax
import jax.numpy as jnp
from jax import lax
from jax.experimental import pallas as pl
from jax.experimental.pallas import tpu as pltpu


def _make_kernel(Tc, B, H, L, IN, OUT, compute_dtype):
    f32 = jnp.float32
    cdt = compute_dtype

    def kernel(x_ref, h0_ref, c0_ref,
               wl1_ref, bl1_ref,
               w_ih_ref, w_hh_ref, b_ref,
               wl2_ref, bl2_ref,
               out_ref,
               seq_scr, ig_scr, fg_scr, gg_scr, og_scr,
               h_state, c_state):
        ci = pl.program_id(0)

        # ---- load initial (h, c) into the persistent carry scratch on the first chunk ----
        @pl.when(ci == 0)
        def _():
            h_state[...] = h0_ref[...]
            c_state[...] = c0_ref[...]

        # ---- linear1 + ReLU, fused over the whole chunk: [Tc*B, IN] @ [IN, H] ----
        x_flat = x_ref[...].reshape(Tc * B, IN).astype(cdt)
        a = jnp.maximum(
            jnp.dot(x_flat, wl1_ref[...], preferred_element_type=f32) + bl1_ref[...],
            0.0)
        seq_scr[...] = a.reshape(Tc, B, H)

        gate_scrs = (ig_scr, fg_scr, gg_scr, og_scr)

        # ---- stacked unidirectional LSTM ----
        for l in range(L):
            # Hoisted input projection for every timestep of the chunk: one big matmul
            # per gate ([Tc*B, H] @ [H, H]) with the combined bias (b_ih + b_hh) folded in.
            x_l = seq_scr[...].reshape(Tc * B, H).astype(cdt)
            for k in range(4):
                gate_scrs[k][...] = (
                    jnp.dot(x_l, w_ih_ref[l, k], preferred_element_type=f32)
                    + b_ref[l, k]).reshape(Tc, B, H)

            # Recurrent weights split per gate -> each gate is its own [B, H] tile,
            # no non-128-aligned lane slicing inside the serial recurrence.
            whh_i = w_hh_ref[l, 0].astype(cdt)
            whh_f = w_hh_ref[l, 1].astype(cdt)
            whh_g = w_hh_ref[l, 2].astype(cdt)
            whh_o = w_hh_ref[l, 3].astype(cdt)

            def body(t, carry):
                h, c = carry
                hc_ = h.astype(cdt)
                i_g = jax.nn.sigmoid(
                    ig_scr[t] + jnp.dot(hc_, whh_i, preferred_element_type=f32))
                f_g = jax.nn.sigmoid(
                    fg_scr[t] + jnp.dot(hc_, whh_f, preferred_element_type=f32))
                g_g = jnp.tanh(
                    gg_scr[t] + jnp.dot(hc_, whh_g, preferred_element_type=f32))
                o_g = jax.nn.sigmoid(
                    og_scr[t] + jnp.dot(hc_, whh_o, preferred_element_type=f32))
                c = f_g * c + i_g * g_g
                h = o_g * jnp.tanh(c)
                seq_scr[t] = h                       # this layer's output for timestep t
                return (h, c)

            hT, cT = lax.fori_loop(0, Tc, body, (h_state[l], c_state[l]))
            h_state[l] = hT                          # carry across chunks
            c_state[l] = cT

        # ---- linear2, fused over the whole chunk: [Tc*B, H] @ [H, OUT] ----
        y = (jnp.dot(seq_scr[...].reshape(Tc * B, H).astype(cdt),
                     wl2_ref[...], preferred_element_type=f32) + bl2_ref[...])
        out_ref[...] = y.reshape(Tc, B, OUT)

    return kernel


def rnn_forward(x_list, params, *, hidden_size, num_layers, output_size,
                init=None, chunk_t=128, compute_dtype=jnp.float32):
    """x_list: list of [num_frames_i, input_size] arrays. Returns list of [num_frames_i, output_size]."""
    lengths = [int(xi.shape[0]) for xi in x_list]
    T = max(lengths)
    B = len(x_list)
    IN = int(x_list[0].shape[1])
    H, L, OUT = hidden_size, num_layers, output_size

    # Chunk the time axis so x / out stream HBM<->VMEM (VMEM-safe for large T on v7x).
    Tc = min(chunk_t, T)
    n_chunks = -(-T // Tc)
    T_pad = n_chunks * Tc

    # pad_sequence equivalent: single stack of pre-padded arrays (time-major [T_pad, B, IN]).
    x_pad = jnp.stack(
        [jnp.pad(xi.astype(jnp.float32), ((0, T_pad - int(xi.shape[0])), (0, 0)))
         for xi in x_list], axis=1)

    if init is None:
        h0 = jnp.zeros((L, B, H), jnp.float32)
        c0 = jnp.zeros((L, B, H), jnp.float32)
    else:
        h0, c0 = init
        h0 = jnp.asarray(h0, jnp.float32)
        c0 = jnp.asarray(c0, jnp.float32)

    wl1, bl1, w_ih, w_hh, b_gate, wl2, bl2 = params
    # Cast matmul weights to the compute dtype (biases stay f32, added post-accumulation).
    wl1_c = wl1.astype(compute_dtype)
    w_ih_c = w_ih.astype(compute_dtype)
    w_hh_c = w_hh.astype(compute_dtype)
    wl2_c = wl2.astype(compute_dtype)
    bl1_c = bl1.astype(jnp.float32)
    b_gate_c = b_gate.astype(jnp.float32)
    bl2_c = bl2.astype(jnp.float32)

    kernel = _make_kernel(Tc, B, H, L, IN, OUT, compute_dtype)

    def resident_spec(a):
        nd = a.ndim
        return pl.BlockSpec(a.shape, lambda c, nd=nd: (0,) * nd)

    resident_args = (h0, c0, wl1_c, bl1_c, w_ih_c, w_hh_c, b_gate_c, wl2_c, bl2_c)
    in_specs = ([pl.BlockSpec((Tc, B, IN), lambda c: (c, 0, 0))]
                + [resident_spec(a) for a in resident_args])
    out_spec = pl.BlockSpec((Tc, B, OUT), lambda c: (c, 0, 0))

    scratch_shapes = (
        [pltpu.VMEM((Tc, B, H), jnp.float32)] * 5      # seq, i, f, g, o gate slabs
        + [pltpu.VMEM((L, B, H), jnp.float32)] * 2     # h_state, c_state carries
    )

    out = pl.pallas_call(
        kernel,
        out_shape=jax.ShapeDtypeStruct((T_pad, B, OUT), jnp.float32),
        grid_spec=pltpu.PrefetchScalarGridSpec(
            num_scalar_prefetch=0,
            grid=(n_chunks,),
            in_specs=in_specs,
            out_specs=out_spec,
            scratch_shapes=scratch_shapes),
        compiler_params=pltpu.CompilerParams(
            dimension_semantics=("arbitrary",),        # sequential: (h, c) carried across chunks
            vmem_limit_bytes=32 * 1024 * 1024),
    )(x_pad, *resident_args)

    # pad_packed_sequence + per-sample slicing
    return [out[:l, i] for i, l in enumerate(lengths)]


def init_params(key, IN, OUT, H, L):
    """Deterministic synthetic weights, pre-transposed & pre-split per gate.

    w_ih[l, k] == torch weight_ih_l{l}[k*H:(k+1)*H, :].T   (gate order i, f, g, o)
    w_hh[l, k] == torch weight_hh_l{l}[k*H:(k+1)*H, :].T
    b_gate[l, k, 0] == (bias_ih_l{l} + bias_hh_l{l})[k*H:(k+1)*H]
    """
    ks = jax.random.split(key, 9)

    def rn(k, shape, scale=0.1):
        return jax.random.normal(k, shape, jnp.float32) * scale

    wl1 = rn(ks[0], (IN, H));          bl1 = rn(ks[1], (1, H))        # linear1
    w_ih = rn(ks[2], (L, 4, H, H));    w_hh = rn(ks[3], (L, 4, H, H)) # LSTM (input size == H)
    b_gate = rn(ks[4], (L, 4, 1, H))                                   # bias_ih + bias_hh
    wl2 = rn(ks[5], (H, OUT));         bl2 = rn(ks[6], (1, OUT))       # linear2
    return (wl1, bl1, w_ih, w_hh, b_gate, wl2, bl2)


def reference_forward(x_list, params, *, hidden_size, num_layers, init=None):
    """Pure-JAX reference (per-sample, per-timestep) for correctness checking."""
    wl1, bl1, w_ih, w_hh, b_gate, wl2, bl2 = params
    H, L = hidden_size, num_layers
    B = len(x_list)
    if init is None:
        h0 = jnp.zeros((L, B, H), jnp.float32)
        c0 = jnp.zeros((L, B, H), jnp.float32)
    else:
        h0, c0 = init
    outs = []
    for i, xi in enumerate(x_list):
        inp = jnp.maximum(xi @ wl1 + bl1, 0.0)          # [Ti, H]
        for l in range(L):
            h = h0[l, i]
            c = c0[l, i]
            ys = []
            for t in range(inp.shape[0]):
                xt = inp[t]
                i_g = jax.nn.sigmoid(xt @ w_ih[l, 0] + b_gate[l, 0, 0] + h @ w_hh[l, 0])
                f_g = jax.nn.sigmoid(xt @ w_ih[l, 1] + b_gate[l, 1, 0] + h @ w_hh[l, 1])
                g_g = jnp.tanh(      xt @ w_ih[l, 2] + b_gate[l, 2, 0] + h @ w_hh[l, 2])
                o_g = jax.nn.sigmoid(xt @ w_ih[l, 3] + b_gate[l, 3, 0] + h @ w_hh[l, 3])
                c = f_g * c + i_g * g_g
                h = o_g * jnp.tanh(c)
                ys.append(h)
            inp = jnp.stack(ys)
        outs.append(inp @ wl2 + bl2)
    return outs


if __name__ == "__main__":
    input_size, output_size, hidden_size, num_layers = 12, 6, 32, 2
    key = jax.random.PRNGKey(0)
    k_par, k1, k2 = jax.random.split(key, 3)

    params = init_params(k_par, input_size, output_size, hidden_size, num_layers)

    # batch of 2 variable-length sequences (like the torch list-of-tensors input)
    x_list = [jax.random.normal(k1, (8, input_size), jnp.float32),
              jax.random.normal(k2, (6, input_size), jnp.float32)]

    outs = rnn_forward(x_list, params,
                       hidden_size=hidden_size, num_layers=num_layers,
                       output_size=output_size)
    outs = [jax.block_until_ready(o) for o in outs]

    assert outs[0].shape == (8, output_size) and outs[1].shape == (6, output_size)
    assert all(bool(jnp.all(jnp.isfinite(o))) for o in outs)

    # sanity check against a plain-JAX reference (loose tol: MXU f32 matmul precision)
    refs = reference_forward(x_list, params,
                             hidden_size=hidden_size, num_layers=num_layers)
    for o, r in zip(outs, refs):
        assert bool(jnp.allclose(o, r, atol=5e-2, rtol=5e-2)), "mismatch vs reference"

    print("KERNEL_OK")
</pallas_src>

<mosaic_0001>
module attributes {stable_mosaic.version = 11 : i64} {
  func.func @kernel(%arg0: i32, %arg1: memref<8x2x12xf32, #tpu.memory_space<vmem>>, %arg2: memref<2x2x32xf32, #tpu.memory_space<vmem>>, %arg3: memref<2x2x32xf32, #tpu.memory_space<vmem>>, %arg4: memref<12x32xf32, #tpu.memory_space<vmem>>, %arg5: memref<1x32xf32, #tpu.memory_space<vmem>>, %arg6: memref<2x4x32x32xf32, #tpu.memory_space<vmem>>, %arg7: memref<2x4x32x32xf32, #tpu.memory_space<vmem>>, %arg8: memref<2x4x1x32xf32, #tpu.memory_space<vmem>>, %arg9: memref<32x6xf32, #tpu.memory_space<vmem>>, %arg10: memref<1x6xf32, #tpu.memory_space<vmem>>, %arg11: memref<8x2x6xf32, #tpu.memory_space<vmem>>, %arg12: memref<8x2x32xf32, #tpu.memory_space<vmem>>, %arg13: memref<8x2x32xf32, #tpu.memory_space<vmem>>, %arg14: memref<8x2x32xf32, #tpu.memory_space<vmem>>, %arg15: memref<8x2x32xf32, #tpu.memory_space<vmem>>, %arg16: memref<8x2x32xf32, #tpu.memory_space<vmem>>, %arg17: memref<2x2x32xf32, #tpu.memory_space<vmem>>, %arg18: memref<2x2x32xf32, #tpu.memory_space<vmem>>) attributes {dimension_semantics = [#tpu.dimension_semantics<arbitrary>], iteration_bounds = array<i64: 1>, scalar_prefetch = 0 : i64, scratch_operands = 7 : i64, tpu.core_type = #tpu.core_type<tc>, window_params = [{transform_indices = @transform_0, window_bounds = array<i64: 8, 2, 12>}, {pipeline_mode = #tpu.pipeline_mode<synchronous>, transform_indices = @transform_1, window_bounds = array<i64: 2, 2, 32>}, {pipeline_mode = #tpu.pipeline_mode<synchronous>, transform_indices = @transform_2, window_bounds = array<i64: 2, 2, 32>}, {pipeline_mode = #tpu.pipeline_mode<synchronous>, transform_indices = @transform_3, window_bounds = array<i64: 12, 32>}, {pipeline_mode = #tpu.pipeline_mode<synchronous>, transform_indices = @transform_4, window_bounds = array<i64: 1, 32>}, {pipeline_mode = #tpu.pipeline_mode<synchronous>, transform_indices = @transform_5, window_bounds = array<i64: 2, 4, 32, 32>}, {pipeline_mode = #tpu.pipeline_mode<synchronous>, transform_indices = @transform_6, window_bounds = array<i64: 2, 4, 32, 32>}, {pipeline_mode = #tpu.pipeline_mode<synchronous>, transform_indices = @transform_7, window_bounds = array<i64: 2, 4, 1, 32>}, {pipeline_mode = #tpu.pipeline_mode<synchronous>, transform_indices = @transform_8, window_bounds = array<i64: 32, 6>}, {pipeline_mode = #tpu.pipeline_mode<synchronous>, transform_indices = @transform_9, window_bounds = array<i64: 1, 6>}, {transform_indices = @transform_10, window_bounds = array<i64: 8, 2, 6>}]} {
    %c0_i32 = arith.constant 0 : i32
    %0 = arith.cmpi eq, %arg0, %c0_i32 : i32
    %1 = arith.extui %0 : i1 to i32
    %c0_i32_0 = arith.constant 0 : i32
    %2 = arith.cmpi ne, %1, %c0_i32_0 : i32
    scf.if %2 {
      %c0_183 = arith.constant 0 : index
      %c0_184 = arith.constant 0 : index
      %c0_185 = arith.constant 0 : index
      %139 = vector.load %arg2[%c0_183, %c0_184, %c0_185] : memref<2x2x32xf32, #tpu.memory_space<vmem>>, vector<2x2x32xf32>
      %c0_186 = arith.constant 0 : index
      %c0_187 = arith.constant 0 : index
      %c0_188 = arith.constant 0 : index
      %140 = vector.load %arg17[%c0_186, %c0_187, %c0_188] : memref<2x2x32xf32, #tpu.memory_space<vmem>>, vector<2x2x32xf32>
      tpu.vector_store %arg17[%c0_186, %c0_187, %c0_188], %139 {strides = array<i32>} : memref<2x2x32xf32, #tpu.memory_space<vmem>>, vector<2x2x32xf32>,
      %c0_189 = arith.constant 0 : index
      %c0_190 = arith.constant 0 : index
      %c0_191 = arith.constant 0 : index
      %141 = vector.load %arg3[%c0_189, %c0_190, %c0_191] : memref<2x2x32xf32, #tpu.memory_space<vmem>>, vector<2x2x32xf32>
      %c0_192 = arith.constant 0 : index
      %c0_193 = arith.constant 0 : index
      %c0_194 = arith.constant 0 : index
      %142 = vector.load %arg18[%c0_192, %c0_193, %c0_194] : memref<2x2x32xf32, #tpu.memory_space<vmem>>, vector<2x2x32xf32>
      tpu.vector_store %arg18[%c0_192, %c0_193, %c0_194], %141 {strides = array<i32>} : memref<2x2x32xf32, #tpu.memory_space<vmem>>, vector<2x2x32xf32>,
    } else {
    }
    %c0 = arith.constant 0 : index
    %c0_1 = arith.constant 0 : index
    %c0_2 = arith.constant 0 : index
    %3 = vector.load %arg1[%c0, %c0_1, %c0_2] : memref<8x2x12xf32, #tpu.memory_space<vmem>>, vector<8x2x12xf32>
    %4 = vector.shape_cast %3 : vector<8x2x12xf32> to vector<16x12xf32>
    %c0_3 = arith.constant 0 : index
    %c0_4 = arith.constant 0 : index
    %5 = vector.load %arg4[%c0_3, %c0_4] : memref<12x32xf32, #tpu.memory_space<vmem>>, vector<12x32xf32>
    %cst = arith.constant dense<0.000000e+00> : vector<16x32xf32>
    %6 = tpu.matmul %4, %5, %cst {dimension_numbers = #tpu.dot_dimension_numbers<[1], [0], [0], [1], [0, 0, 1, 1], [], []>} : vector<16x12xf32>, vector<12x32xf32>, vector<16x32xf32> -> vector<16x32xf32>
    %c0_5 = arith.constant 0 : index
    %c0_6 = arith.constant 0 : index
    %7 = vector.load %arg5[%c0_5, %c0_6] : memref<1x32xf32, #tpu.memory_space<vmem>>, vector<1x32xf32>
    %8 = vector.broadcast %7 : vector<1x32xf32> to vector<16x32xf32>
    %9 = arith.addf %6, %8 : vector<16x32xf32>
    %cst_7 = arith.constant 0.000000e+00 : f32
    %10 = vector.broadcast %cst_7 : f32 to vector<16x32xf32>
    %11 = arith.maximumf %9, %10 : vector<16x32xf32>
    %12 = vector.shape_cast %11 : vector<16x32xf32> to vector<8x2x32xf32>
    %c0_8 = arith.constant 0 : index
    %c0_9 = arith.constant 0 : index
    %c0_10 = arith.constant 0 : index
    %13 = vector.load %arg12[%c0_8, %c0_9, %c0_10] : memref<8x2x32xf32, #tpu.memory_space<vmem>>, vector<8x2x32xf32>
    tpu.vector_store %arg12[%c0_8, %c0_9, %c0_10], %12 {strides = array<i32>} : memref<8x2x32xf32, #tpu.memory_space<vmem>>, vector<8x2x32xf32>,
    %c0_11 = arith.constant 0 : index
    %c0_12 = arith.constant 0 : index
    %c0_13 = arith.constant 0 : index
    %14 = vector.load %arg12[%c0_11, %c0_12, %c0_13] : memref<8x2x32xf32, #tpu.memory_space<vmem>>, vector<8x2x32xf32>
    %15 = vector.shape_cast %14 : vector<8x2x32xf32> to vector<16x32xf32>
    %c0_14 = arith.constant 0 : index
    %c0_15 = arith.constant 0 : index
    %c0_16 = arith.constant 0 : index
    %c0_17 = arith.constant 0 : index
    %16 = vector.load %arg6[%c0_14, %c0_15, %c0_16, %c0_17] : memref<2x4x32x32xf32, #tpu.memory_space<vmem>>, vector<1x1x32x32xf32>
    %17 = vector.shape_cast %16 : vector<1x1x32x32xf32> to vector<32x32xf32>
    %cst_18 = arith.constant dense<0.000000e+00> : vector<16x32xf32>
    %18 = tpu.matmul %15, %17, %cst_18 {dimension_numbers = #tpu.dot_dimension_numbers<[1], [0], [0], [1], [0, 0, 1, 1], [], []>} : vector<16x32xf32>, vector<32x32xf32>, vector<16x32xf32> -> vector<16x32xf32>
    %c0_19 = arith.constant 0 : index
    %c0_20 = arith.constant 0 : index
    %c0_21 = arith.constant 0 : index
    %c0_22 = arith.constant 0 : index
    %19 = vector.load %arg8[%c0_19, %c0_20, %c0_21, %c0_22] : memref<2x4x1x32xf32, #tpu.memory_space<vmem>>, vector<1x1x1x32xf32>
    %20 = vector.shape_cast %19 : vector<1x1x1x32xf32> to vector<1x32xf32>
    %21 = vector.broadcast %20 : vector<1x32xf32> to vector<16x32xf32>
    %22 = arith.addf %18, %21 : vector<16x32xf32>
    %23 = vector.shape_cast %22 : vector<16x32xf32> to vector<8x2x32xf32>
    %c0_23 = arith.constant 0 : index
    %c0_24 = arith.constant 0 : index
    %c0_25 = arith.constant 0 : index
    %24 = vector.load %arg13[%c0_23, %c0_24, %c0_25] : memref<8x2x32xf32, #tpu.memory_space<vmem>>, vector<8x2x32xf32>
    tpu.vector_store %arg13[%c0_23, %c0_24, %c0_25], %23 {strides = array<i32>} : memref<8x2x32xf32, #tpu.memory_space<vmem>>, vector<8x2x32xf32>,
    %c0_26 = arith.constant 0 : index
    %c1 = arith.constant 1 : index
    %c0_27 = arith.constant 0 : index
    %c0_28 = arith.constant 0 : index
    %25 = vector.load %arg6[%c0_26, %c1, %c0_27, %c0_28] : memref<2x4x32x32xf32, #tpu.memory_space<vmem>>, vector<1x1x32x32xf32>
    %26 = vector.shape_cast %25 : vector<1x1x32x32xf32> to vector<32x32xf32>
    %cst_29 = arith.constant dense<0.000000e+00> : vector<16x32xf32>
    %27 = tpu.matmul %15, %26, %cst_29 {dimension_numbers = #tpu.dot_dimension_numbers<[1], [0], [0], [1], [0, 0, 1, 1], [], []>} : vector<16x32xf32>, vector<32x32xf32>, vector<16x32xf32> -> vector<16x32xf32>
    %c0_30 = arith.constant 0 : index
    %c1_31 = arith.constant 1 : index
    %c0_32 = arith.constant 0 : index
    %c0_33 = arith.constant 0 : index
    %28 = vector.load %arg8[%c0_30, %c1_31, %c0_32, %c0_33] : memref<2x4x1x32xf32, #tpu.memory_space<vmem>>, vector<1x1x1x32xf32>
    %29 = vector.shape_cast %28 : vector<1x1x1x32xf32> to vector<1x32xf32>
    %30 = vector.broadcast %29 : vector<1x32xf32> to vector<16x32xf32>
    %31 = arith.addf %27, %30 : vector<16x32xf32>
    %32 = vector.shape_cast %31 : vector<16x32xf32> to vector<8x2x32xf32>
    %c0_34 = arith.constant 0 : index
    %c0_35 = arith.constant 0 : index
    %c0_36 = arith.constant 0 : index
    %33 = vector.load %arg14[%c0_34, %c0_35, %c0_36] : memref<8x2x32xf32, #tpu.memory_space<vmem>>, vector<8x2x32xf32>
    tpu.vector_store %arg14[%c0_34, %c0_35, %c0_36], %32 {strides = array<i32>} : memref<8x2x32xf32, #tpu.memory_space<vmem>>, vector<8x2x32xf32>,
    %c0_37 = arith.constant 0 : index
    %c2 = arith.constant 2 : index
    %c0_38 = arith.constant 0 : index
    %c0_39 = arith.constant 0 : index
    %34 = vector.load %arg6[%c0_37, %c2, %c0_38, %c0_39] : memref<2x4x32x32xf32, #tpu.memory_space<vmem>>, vector<1x1x32x32xf32>
    %35 = vector.shape_cast %34 : vector<1x1x32x32xf32> to vector<32x32xf32>
    %cst_40 = arith.constant dense<0.000000e+00> : vector<16x32xf32>
    %36 = tpu.matmul %15, %35, %cst_40 {dimension_numbers = #tpu.dot_dimension_numbers<[1], [0], [0], [1], [0, 0, 1, 1], [], []>} : vector<16x32xf32>, vector<32x32xf32>, vector<16x32xf32> -> vector<16x32xf32>
    %c0_41 = arith.constant 0 : index
    %c2_42 = arith.constant 2 : index
    %c0_43 = arith.constant 0 : index
    %c0_44 = arith.constant 0 : index
    %37 = vector.load %arg8[%c0_41, %c2_42, %c0_43, %c0_44] : memref<2x4x1x32xf32, #tpu.memory_space<vmem>>, vector<1x1x1x32xf32>
    %38 = vector.shape_cast %37 : vector<1x1x1x32xf32> to vector<1x32xf32>
    %39 = vector.broadcast %38 : vector<1x32xf32> to vector<16x32xf32>
    %40 = arith.addf %36, %39 : vector<16x32xf32>
    %41 = vector.shape_cast %40 : vector<16x32xf32> to vector<8x2x32xf32>
    %c0_45 = arith.constant 0 : index
    %c0_46 = arith.constant 0 : index
    %c0_47 = arith.constant 0 : index
    %42 = vector.load %arg15[%c0_45, %c0_46, %c0_47] : memref<8x2x32xf32, #tpu.memory_space<vmem>>, vector<8x2x32xf32>
    tpu.vector_store %arg15[%c0_45, %c0_46, %c0_47], %41 {strides = array<i32>} : memref<8x2x32xf32, #tpu.memory_space<vmem>>, vector<8x2x32xf32>,
    %c0_48 = arith.constant 0 : index
    %c3 = arith.constant 3 : index
    %c0_49 = arith.constant 0 : index
    %c0_50 = arith.constant 0 : index
    %43 = vector.load %arg6[%c0_48, %c3, %c0_49, %c0_50] : memref<2x4x32x32xf32, #tpu.memory_space<vmem>>, vector<1x1x32x32xf32>
    %44 = vector.shape_cast %43 : vector<1x1x32x32xf32> to vector<32x32xf32>
    %cst_51 = arith.constant dense<0.000000e+00> : vector<16x32xf32>
    %45 = tpu.matmul %15, %44, %cst_51 {dimension_numbers = #tpu.dot_dimension_numbers<[1], [0], [0], [1], [0, 0, 1, 1], [], []>} : vector<16x32xf32>, vector<32x32xf32>, vector<16x32xf32> -> vector<16x32xf32>
    %c0_52 = arith.constant 0 : index
    %c3_53 = arith.constant 3 : index
    %c0_54 = arith.constant 0 : index
    %c0_55 = arith.constant 0 : index
    %46 = vector.load %arg8[%c0_52, %c3_53, %c0_54, %c0_55] : memref<2x4x1x32xf32, #tpu.memory_space<vmem>>, vector<1x1x1x32xf32>
    %47 = vector.shape_cast %46 : vector<1x1x1x32xf32> to vector<1x32xf32>
    %48 = vector.broadcast %47 : vector<1x32xf32> to vector<16x32xf32>
    %49 = arith.addf %45, %48 : vector<16x32xf32>
    %50 = vector.shape_cast %49 : vector<16x32xf32> to vector<8x2x32xf32>
    %c0_56 = arith.constant 0 : index
    %c0_57 = arith.constant 0 : index
    %c0_58 = arith.constant 0 : index
    %51 = vector.load %arg16[%c0_56, %c0_57, %c0_58] : memref<8x2x32xf32, #tpu.memory_space<vmem>>, vector<8x2x32xf32>
    tpu.vector_store %arg16[%c0_56, %c0_57, %c0_58], %50 {strides = array<i32>} : memref<8x2x32xf32, #tpu.memory_space<vmem>>, vector<8x2x32xf32>,
    %c0_59 = arith.constant 0 : index
    %c0_60 = arith.constant 0 : index
    %c0_61 = arith.constant 0 : index
    %c0_62 = arith.constant 0 : index
    %52 = vector.load %arg7[%c0_59, %c0_60, %c0_61, %c0_62] : memref<2x4x32x32xf32, #tpu.memory_space<vmem>>, vector<1x1x32x32xf32>
    %53 = vector.shape_cast %52 : vector<1x1x32x32xf32> to vector<32x32xf32>
    %c0_63 = arith.constant 0 : index
    %c1_64 = arith.constant 1 : index
    %c0_65 = arith.constant 0 : index
    %c0_66 = arith.constant 0 : index
    %54 = vector.load %arg7[%c0_63, %c1_64, %c0_65, %c0_66] : memref<2x4x32x32xf32, #tpu.memory_space<vmem>>, vector<1x1x32x32xf32>
    %55 = vector.shape_cast %54 : vector<1x1x32x32xf32> to vector<32x32xf32>
    %c0_67 = arith.constant 0 : index
    %c2_68 = arith.constant 2 : index
    %c0_69 = arith.constant 0 : index
    %c0_70 = arith.constant 0 : index
    %56 = vector.load %arg7[%c0_67, %c2_68, %c0_69, %c0_70] : memref<2x4x32x32xf32, #tpu.memory_space<vmem>>, vector<1x1x32x32xf32>
    %57 = vector.shape_cast %56 : vector<1x1x32x32xf32> to vector<32x32xf32>
    %c0_71 = arith.constant 0 : index
    %c3_72 = arith.constant 3 : index
    %c0_73 = arith.constant 0 : index
    %c0_74 = arith.constant 0 : index
    %58 = vector.load %arg7[%c0_71, %c3_72, %c0_73, %c0_74] : memref<2x4x32x32xf32, #tpu.memory_space<vmem>>, vector<1x1x32x32xf32>
    %59 = vector.shape_cast %58 : vector<1x1x32x32xf32> to vector<32x32xf32>
    %c0_75 = arith.constant 0 : index
    %c0_76 = arith.constant 0 : index
    %c0_77 = arith.constant 0 : index
    %60 = vector.load %arg17[%c0_75, %c0_76, %c0_77] : memref<2x2x32xf32, #tpu.memory_space<vmem>>, vector<1x2x32xf32>
    %61 = vector.shape_cast %60 : vector<1x2x32xf32> to vector<2x32xf32>
    %c0_78 = arith.constant 0 : index
    %c0_79 = arith.constant 0 : index
    %c0_80 = arith.constant 0 : index
    %62 = vector.load %arg18[%c0_78, %c0_79, %c0_80] : memref<2x2x32xf32, #tpu.memory_space<vmem>>, vector<1x2x32xf32>
    %63 = vector.shape_cast %62 : vector<1x2x32xf32> to vector<2x32xf32>
    %c0_i32_81 = arith.constant 0 : i32
    %c8_i32 = arith.constant 8 : i32
    %64 = arith.addi %c0_i32_81, %c8_i32 : i32
    %c1_i32 = arith.constant 1 : i32
    %65:2 = scf.for %arg19 = %c0_i32_81 to %64 step %c1_i32 iter_args(%arg20 = %61, %arg21 = %63) -> (vector<2x32xf32>, vector<2x32xf32>)  : i32 {
      %139 = arith.index_cast %arg19 : i32 to index
      %c0_183 = arith.constant 0 : index
      %c0_184 = arith.constant 0 : index
      %140 = vector.load %arg13[%139, %c0_183, %c0_184] : memref<8x2x32xf32, #tpu.memory_space<vmem>>, vector<1x2x32xf32>
      %141 = vector.shape_cast %140 : vector<1x2x32xf32> to vector<2x32xf32>
      %cst_185 = arith.constant dense<0.000000e+00> : vector<2x32xf32>
      %142 = tpu.matmul %arg20, %53, %cst_185 {dimension_numbers = #tpu.dot_dimension_numbers<[1], [0], [0], [1], [0, 0, 1, 1], [], []>} : vector<2x32xf32>, vector<32x32xf32>, vector<2x32xf32> -> vector<2x32xf32>
      %143 = arith.addf %141, %142 : vector<2x32xf32>
      %144 = arith.negf %143 : vector<2x32xf32>
      %145 = math.exp %144 : vector<2x32xf32>
      %cst_186 = arith.constant 1.000000e+00 : f32
      %146 = vector.broadcast %cst_186 : f32 to vector<2x32xf32>
      %147 = arith.addf %146, %145 : vector<2x32xf32>
      %148 = arith.divf %146, %147 : vector<2x32xf32>
      %149 = arith.index_cast %arg19 : i32 to index
      %c0_187 = arith.constant 0 : index
      %c0_188 = arith.constant 0 : index
      %150 = vector.load %arg14[%149, %c0_187, %c0_188] : memref<8x2x32xf32, #tpu.memory_space<vmem>>, vector<1x2x32xf32>
      %151 = vector.shape_cast %150 : vector<1x2x32xf32> to vector<2x32xf32>
      %cst_189 = arith.constant dense<0.000000e+00> : vector<2x32xf32>
      %152 = tpu.matmul %arg20, %55, %cst_189 {dimension_numbers = #tpu.dot_dimension_numbers<[1], [0], [0], [1], [0, 0, 1, 1], [], []>} : vector<2x32xf32>, vector<32x32xf32>, vector<2x32xf32> -> vector<2x32xf32>
      %153 = arith.addf %151, %152 : vector<2x32xf32>
      %154 = arith.negf %153 : vector<2x32xf32>
      %155 = math.exp %154 : vector<2x32xf32>
      %cst_190 = arith.constant 1.000000e+00 : f32
      %156 = vector.broadcast %cst_190 : f32 to vector<2x32xf32>
      %157 = arith.addf %156, %155 : vector<2x32xf32>
      %158 = arith.divf %156, %157 : vector<2x32xf32>
      %159 = arith.index_cast %arg19 : i32 to index
      %c0_191 = arith.constant 0 : index
      %c0_192 = arith.constant 0 : index
      %160 = vector.load %arg15[%159, %c0_191, %c0_192] : memref<8x2x32xf32, #tpu.memory_space<vmem>>, vector<1x2x32xf32>
      %161 = vector.shape_cast %160 : vector<1x2x32xf32> to vector<2x32xf32>
      %cst_193 = arith.constant dense<0.000000e+00> : vector<2x32xf32>
      %162 = tpu.matmul %arg20, %57, %cst_193 {dimension_numbers = #tpu.dot_dimension_numbers<[1], [0], [0], [1], [0, 0, 1, 1], [], []>} : vector<2x32xf32>, vector<32x32xf32>, vector<2x32xf32> -> vector<2x32xf32>
      %163 = arith.addf %161, %162 : vector<2x32xf32>
      %164 = math.tanh %163 : vector<2x32xf32>
      %165 = arith.index_cast %arg19 : i32 to index
      %c0_194 = arith.constant 0 : index
      %c0_195 = arith.constant 0 : index
      %166 = vector.load %arg16[%165, %c0_194, %c0_195] : memref<8x2x32xf32, #tpu.memory_space<vmem>>, vector<1x2x32xf32>
      %167 = vector.shape_cast %166 : vector<1x2x32xf32> to vector<2x32xf32>
      %cst_196 = arith.constant dense<0.000000e+00> : vector<2x32xf32>
      %168 = tpu.matmul %arg20, %59, %cst_196 {dimension_numbers = #tpu.dot_dimension_numbers<[1], [0], [0], [1], [0, 0, 1, 1], [], []>} : vector<2x32xf32>, vector<32x32xf32>, vector<2x32xf32> -> vector<2x32xf32>
      %169 = arith.addf %167, %168 : vector<2x32xf32>
      %170 = arith.negf %169 : vector<2x32xf32>
      %171 = math.exp %170 : vector<2x32xf32>
      %cst_197 = arith.constant 1.000000e+00 : f32
      %172 = vector.broadcast %cst_197 : f32 to vector<2x32xf32>
      %173 = arith.addf %172, %171 : vector<2x32xf32>
      %174 = arith.divf %172, %173 : vector<2x32xf32>
      %175 = arith.mulf %158, %arg21 : vector<2x32xf32>
      %176 = arith.mulf %148, %164 : vector<2x32xf32>
      %177 = arith.addf %175, %176 : vector<2x32xf32>
      %178 = math.tanh %177 : vector<2x32xf32>
      %179 = arith.mulf %174, %178 : vector<2x32xf32>
      %180 = arith.index_cast %arg19 : i32 to index
      %c0_198 = arith.constant 0 : index
      %c0_199 = arith.constant 0 : index
      %181 = vector.load %arg12[%180, %c0_198, %c0_199] : memref<8x2x32xf32, #tpu.memory_space<vmem>>, vector<1x2x32xf32>
      %182 = vector.shape_cast %181 : vector<1x2x32xf32> to vector<2x32xf32>
      %183 = vector.shape_cast %179 : vector<2x32xf32> to vector<1x2x32xf32>
      tpu.vector_store %arg12[%180, %c0_198, %c0_199], %183 {strides = array<i32>} : memref<8x2x32xf32, #tpu.memory_space<vmem>>, vector<1x2x32xf32>,
      scf.yield %179, %177 : vector<2x32xf32>, vector<2x32xf32>
    }
    %c8_i32_82 = arith.constant 8 : i32
    %c0_83 = arith.constant 0 : index
    %c0_84 = arith.constant 0 : index
    %c0_85 = arith.constant 0 : index
    %66 = vector.load %arg17[%c0_83, %c0_84, %c0_85] : memref<2x2x32xf32, #tpu.memory_space<vmem>>, vector<1x2x32xf32>
    %67 = vector.shape_cast %66 : vector<1x2x32xf32> to vector<2x32xf32>
    %68 = vector.shape_cast %65#0 : vector<2x32xf32> to vector<1x2x32xf32>
    tpu.vector_store %arg17[%c0_83, %c0_84, %c0_85], %68 {strides = array<i32>} : memref<2x2x32xf32, #tpu.memory_space<vmem>>, vector<1x2x32xf32>,
    %c0_86 = arith.constant 0 : index
    %c0_87 = arith.constant 0 : index
    %c0_88 = arith.constant 0 : index
    %69 = vector.load %arg18[%c0_86, %c0_87, %c0_88] : memref<2x2x32xf32, #tpu.memory_space<vmem>>, vector<1x2x32xf32>
    %70 = vector.shape_cast %69 : vector<1x2x32xf32> to vector<2x32xf32>
    %71 = vector.shape_cast %65#1 : vector<2x32xf32> to vector<1x2x32xf32>
    tpu.vector_store %arg18[%c0_86, %c0_87, %c0_88], %71 {strides = array<i32>} : memref<2x2x32xf32, #tpu.memory_space<vmem>>, vector<1x2x32xf32>,
    %c0_89 = arith.constant 0 : index
    %c0_90 = arith.constant 0 : index
    %c0_91 = arith.constant 0 : index
    %72 = vector.load %arg12[%c0_89, %c0_90, %c0_91] : memref<8x2x32xf32, #tpu.memory_space<vmem>>, vector<8x2x32xf32>
    %73 = vector.shape_cast %72 : vector<8x2x32xf32> to vector<16x32xf32>
    %c1_92 = arith.constant 1 : index
    %c0_93 = arith.constant 0 : index
    %c0_94 = arith.constant 0 : index
    %c0_95 = arith.constant 0 : index
    %74 = vector.load %arg6[%c1_92, %c0_93, %c0_94, %c0_95] : memref<2x4x32x32xf32, #tpu.memory_space<vmem>>, vector<1x1x32x32xf32>
    %75 = vector.shape_cast %74 : vector<1x1x32x32xf32> to vector<32x32xf32>
    %cst_96 = arith.constant dense<0.000000e+00> : vector<16x32xf32>
    %76 = tpu.matmul %73, %75, %cst_96 {dimension_numbers = #tpu.dot_dimension_numbers<[1], [0], [0], [1], [0, 0, 1, 1], [], []>} : vector<16x32xf32>, vector<32x32xf32>, vector<16x32xf32> -> vector<16x32xf32>
    %c1_97 = arith.constant 1 : index
    %c0_98 = arith.constant 0 : index
    %c0_99 = arith.constant 0 : index
    %c0_100 = arith.constant 0 : index
    %77 = vector.load %arg8[%c1_97, %c0_98, %c0_99, %c0_100] : memref<2x4x1x32xf32, #tpu.memory_space<vmem>>, vector<1x1x1x32xf32>
    %78 = vector.shape_cast %77 : vector<1x1x1x32xf32> to vector<1x32xf32>
    %79 = vector.broadcast %78 : vector<1x32xf32> to vector<16x32xf32>
    %80 = arith.addf %76, %79 : vector<16x32xf32>
    %81 = vector.shape_cast %80 : vector<16x32xf32> to vector<8x2x32xf32>
    %c0_101 = arith.constant 0 : index
    %c0_102 = arith.constant 0 : index
    %c0_103 = arith.constant 0 : index
    %82 = vector.load %arg13[%c0_101, %c0_102, %c0_103] : memref<8x2x32xf32, #tpu.memory_space<vmem>>, vector<8x2x32xf32>
    tpu.vector_store %arg13[%c0_101, %c0_102, %c0_103], %81 {strides = array<i32>} : memref<8x2x32xf32, #tpu.memory_space<vmem>>, vector<8x2x32xf32>,
    %c1_104 = arith.constant 1 : index
    %c1_105 = arith.constant 1 : index
    %c0_106 = arith.constant 0 : index
    %c0_107 = arith.constant 0 : index
    %83 = vector.load %arg6[%c1_104, %c1_105, %c0_106, %c0_107] : memref<2x4x32x32xf32, #tpu.memory_space<vmem>>, vector<1x1x32x32xf32>
    %84 = vector.shape_cast %83 : vector<1x1x32x32xf32> to vector<32x32xf32>
    %cst_108 = arith.constant dense<0.000000e+00> : vector<16x32xf32>
    %85 = tpu.matmul %73, %84, %cst_108 {dimension_numbers = #tpu.dot_dimension_numbers<[1], [0], [0], [1], [0, 0, 1, 1], [], []>} : vector<16x32xf32>, vector<32x32xf32>, vector<16x32xf32> -> vector<16x32xf32>
    %c1_109 = arith.constant 1 : index
    %c1_110 = arith.constant 1 : index
    %c0_111 = arith.constant 0 : index
    %c0_112 = arith.constant 0 : index
    %86 = vector.load %arg8[%c1_109, %c1_110, %c0_111, %c0_112] : memref<2x4x1x32xf32, #tpu.memory_space<vmem>>, vector<1x1x1x32xf32>
    %87 = vector.shape_cast %86 : vector<1x1x1x32xf32> to vector<1x32xf32>
    %88 = vector.broadcast %87 : vector<1x32xf32> to vector<16x32xf32>
    %89 = arith.addf %85, %88 : vector<16x32xf32>
    %90 = vector.shape_cast %89 : vector<16x32xf32> to vector<8x2x32xf32>
    %c0_113 = arith.constant 0 : index
    %c0_114 = arith.constant 0 : index
    %c0_115 = arith.constant 0 : index
    %91 = vector.load %arg14[%c0_113, %c0_114, %c0_115] : memref<8x2x32xf32, #tpu.memory_space<vmem>>, vector<8x2x32xf32>
    tpu.vector_store %arg14[%c0_113, %c0_114, %c0_115], %90 {strides = array<i32>} : memref<8x2x32xf32, #tpu.memory_space<vmem>>, vector<8x2x32xf32>,
    %c1_116 = arith.constant 1 : index
    %c2_117 = arith.constant 2 : index
    %c0_118 = arith.constant 0 : index
    %c0_119 = arith.constant 0 : index
    %92 = vector.load %arg6[%c1_116, %c2_117, %c0_118, %c0_119] : memref<2x4x32x32xf32, #tpu.memory_space<vmem>>, vector<1x1x32x32xf32>
    %93 = vector.shape_cast %92 : vector<1x1x32x32xf32> to vector<32x32xf32>
    %cst_120 = arith.constant dense<0.000000e+00> : vector<16x32xf32>
    %94 = tpu.matmul %73, %93, %cst_120 {dimension_numbers = #tpu.dot_dimension_numbers<[1], [0], [0], [1], [0, 0, 1, 1], [], []>} : vector<16x32xf32>, vector<32x32xf32>, vector<16x32xf32> -> vector<16x32xf32>
    %c1_121 = arith.constant 1 : index
    %c2_122 = arith.constant 2 : index
    %c0_123 = arith.constant 0 : index
    %c0_124 = arith.constant 0 : index
    %95 = vector.load %arg8[%c1_121, %c2_122, %c0_123, %c0_124] : memref<2x4x1x32xf32, #tpu.memory_space<vmem>>, vector<1x1x1x32xf32>
    %96 = vector.shape_cast %95 : vector<1x1x1x32xf32> to vector<1x32xf32>
    %97 = vector.broadcast %96 : vector<1x32xf32> to vector<16x32xf32>
    %98 = arith.addf %94, %97 : vector<16x32xf32>
    %99 = vector.shape_cast %98 : vector<16x32xf32> to vector<8x2x32xf32>
    %c0_125 = arith.constant 0 : index
    %c0_126 = arith.constant 0 : index
    %c0_127 = arith.constant 0 : index
    %100 = vector.load %arg15[%c0_125, %c0_126, %c0_127] : memref<8x2x32xf32, #tpu.memory_space<vmem>>, vector<8x2x32xf32>
    tpu.vector_store %arg15[%c0_125, %c0_126, %c0_127], %99 {strides = array<i32>} : memref<8x2x32xf32, #tpu.memory_space<vmem>>, vector<8x2x32xf32>,
    %c1_128 = arith.constant 1 : index
    %c3_129 = arith.constant 3 : index
    %c0_130 = arith.constant 0 : index
    %c0_131 = arith.constant 0 : index
    %101 = vector.load %arg6[%c1_128, %c3_129, %c0_130, %c0_131] : memref<2x4x32x32xf32, #tpu.memory_space<vmem>>, vector<1x1x32x32xf32>
    %102 = vector.shape_cast %101 : vector<1x1x32x32xf32> to vector<32x32xf32>
    %cst_132 = arith.constant dense<0.000000e+00> : vector<16x32xf32>
    %103 = tpu.matmul %73, %102, %cst_132 {dimension_numbers = #tpu.dot_dimension_numbers<[1], [0], [0], [1], [0, 0, 1, 1], [], []>} : vector<16x32xf32>, vector<32x32xf32>, vector<16x32xf32> -> vector<16x32xf32>
    %c1_133 = arith.constant 1 : index
    %c3_134 = arith.constant 3 : index
    %c0_135 = arith.constant 0 : index
    %c0_136 = arith.constant 0 : index
    %104 = vector.load %arg8[%c1_133, %c3_134, %c0_135, %c0_136] : memref<2x4x1x32xf32, #tpu.memory_space<vmem>>, vector<1x1x1x32xf32>
    %105 = vector.shape_cast %104 : vector<1x1x1x32xf32> to vector<1x32xf32>
    %106 = vector.broadcast %105 : vector<1x32xf32> to vector<16x32xf32>
    %107 = arith.addf %103, %106 : vector<16x32xf32>
    %108 = vector.shape_cast %107 : vector<16x32xf32> to vector<8x2x32xf32>
    %c0_137 = arith.constant 0 : index
    %c0_138 = arith.constant 0 : index
    %c0_139 = arith.constant 0 : index
    %109 = vector.load %arg16[%c0_137, %c0_138, %c0_139] : memref<8x2x32xf32, #tpu.memory_space<vmem>>, vector<8x2x32xf32>
    tpu.vector_store %arg16[%c0_137, %c0_138, %c0_139], %108 {strides = array<i32>} : memref<8x2x32xf32, #tpu.memory_space<vmem>>, vector<8x2x32xf32>,
    %c1_140 = arith.constant 1 : index
    %c0_141 = arith.constant 0 : index
    %c0_142 = arith.constant 0 : index
    %c0_143 = arith.constant 0 : index
    %110 = vector.load %arg7[%c1_140, %c0_141, %c0_142, %c0_143] : memref<2x4x32x32xf32, #tpu.memory_space<vmem>>, vector<1x1x32x32xf32>
    %111 = vector.shape_cast %110 : vector<1x1x32x32xf32> to vector<32x32xf32>
    %c1_144 = arith.constant 1 : index
    %c1_145 = arith.constant 1 : index
    %c0_146 = arith.constant 0 : index
    %c0_147 = arith.constant 0 : index
    %112 = vector.load %arg7[%c1_144, %c1_145, %c0_146, %c0_147] : memref<2x4x32x32xf32, #tpu.memory_space<vmem>>, vector<1x1x32x32xf32>
    %113 = vector.shape_cast %112 : vector<1x1x32x32xf32> to vector<32x32xf32>
    %c1_148 = arith.constant 1 : index
    %c2_149 = arith.constant 2 : index
    %c0_150 = arith.constant 0 : index
    %c0_151 = arith.constant 0 : index
    %114 = vector.load %arg7[%c1_148, %c2_149, %c0_150, %c0_151] : memref<2x4x32x32xf32, #tpu.memory_space<vmem>>, vector<1x1x32x32xf32>
    %115 = vector.shape_cast %114 : vector<1x1x32x32xf32> to vector<32x32xf32>
    %c1_152 = arith.constant 1 : index
    %c3_153 = arith.constant 3 : index
    %c0_154 = arith.constant 0 : index
    %c0_155 = arith.constant 0 : index
    %116 = vector.load %arg7[%c1_152, %c3_153, %c0_154, %c0_155] : memref<2x4x32x32xf32, #tpu.memory_space<vmem>>, vector<1x1x32x32xf32>
    %117 = vector.shape_cast %116 : vector<1x1x32x32xf32> to vector<32x32xf32>
    %c1_156 = arith.constant 1 : index
    %c0_157 = arith.constant 0 : index
    %c0_158 = arith.constant 0 : index
    %118 = vector.load %arg17[%c1_156, %c0_157, %c0_158] : memref<2x2x32xf32, #tpu.memory_space<vmem>>, vector<1x2x32xf32>
    %119 = vector.shape_cast %118 : vector<1x2x32xf32> to vector<2x32xf32>
    %c1_159 = arith.constant 1 : index
    %c0_160 = arith.constant 0 : index
    %c0_161 = arith.constant 0 : index
    %120 = vector.load %arg18[%c1_159, %c0_160, %c0_161] : memref<2x2x32xf32, #tpu.memory_space<vmem>>, vector<1x2x32xf32>
    %121 = vector.shape_cast %120 : vector<1x2x32xf32> to vector<2x32xf32>
    %c0_i32_162 = arith.constant 0 : i32
    %c8_i32_163 = arith.constant 8 : i32
    %122 = arith.addi %c0_i32_162, %c8_i32_163 : i32
    %c1_i32_164 = arith.constant 1 : i32
    %123:2 = scf.for %arg19 = %c0_i32_162 to %122 step %c1_i32_164 iter_args(%arg20 = %119, %arg21 = %121) -> (vector<2x32xf32>, vector<2x32xf32>)  : i32 {
      %139 = arith.index_cast %arg19 : i32 to index
      %c0_183 = arith.constant 0 : index
      %c0_184 = arith.constant 0 : index
      %140 = vector.load %arg13[%139, %c0_183, %c0_184] : memref<8x2x32xf32, #tpu.memory_space<vmem>>, vector<1x2x32xf32>
      %141 = vector.shape_cast %140 : vector<1x2x32xf32> to vector<2x32xf32>
      %cst_185 = arith.constant dense<0.000000e+00> : vector<2x32xf32>
      %142 = tpu.matmul %arg20, %111, %cst_185 {dimension_numbers = #tpu.dot_dimension_numbers<[1], [0], [0], [1], [0, 0, 1, 1], [], []>} : vector<2x32xf32>, vector<32x32xf32>, vector<2x32xf32> -> vector<2x32xf32>
      %143 = arith.addf %141, %142 : vector<2x32xf32>
      %144 = arith.negf %143 : vector<2x32xf32>
      %145 = math.exp %144 : vector<2x32xf32>
      %cst_186 = arith.constant 1.000000e+00 : f32
      %146 = vector.broadcast %cst_186 : f32 to vector<2x32xf32>
      %147 = arith.addf %146, %145 : vector<2x32xf32>
      %148 = arith.divf %146, %147 : vector<2x32xf32>
      %149 = arith.index_cast %arg19 : i32 to index
      %c0_187 = arith.constant 0 : index
      %c0_188 = arith.constant 0 : index
      %150 = vector.load %arg14[%149, %c0_187, %c0_188] : memref<8x2x32xf32, #tpu.memory_space<vmem>>, vector<1x2x32xf32>
      %151 = vector.shape_cast %150 : vector<1x2x32xf32> to vector<2x32xf32>
      %cst_189 = arith.constant dense<0.000000e+00> : vector<2x32xf32>
      %152 = tpu.matmul %arg20, %113, %cst_189 {dimension_numbers = #tpu.dot_dimension_numbers<[1], [0], [0], [1], [0, 0, 1, 1], [], []>} : vector<2x32xf32>, vector<32x32xf32>, vector<2x32xf32> -> vector<2x32xf32>
      %153 = arith.addf %151, %152 : vector<2x32xf32>
      %154 = arith.negf %153 : vector<2x32xf32>
      %155 = math.exp %154 : vector<2x32xf32>
      %cst_190 = arith.constant 1.000000e+00 : f32
      %156 = vector.broadcast %cst_190 : f32 to vector<2x32xf32>
      %157 = arith.addf %156, %155 : vector<2x32xf32>
      %158 = arith.divf %156, %157 : vector<2x32xf32>
      %159 = arith.index_cast %arg19 : i32 to index
      %c0_191 = arith.constant 0 : index
      %c0_192 = arith.constant 0 : index
      %160 = vector.load %arg15[%159, %c0_191, %c0_192] : memref<8x2x32xf32, #tpu.memory_space<vmem>>, vector<1x2x32xf32>
      %161 = vector.shape_cast %160 : vector<1x2x32xf32> to vector<2x32xf32>
      %cst_193 = arith.constant dense<0.000000e+00> : vector<2x32xf32>
      %162 = tpu.matmul %arg20, %115, %cst_193 {dimension_numbers = #tpu.dot_dimension_numbers<[1], [0], [0], [1], [0, 0, 1, 1], [], []>} : vector<2x32xf32>, vector<32x32xf32>, vector<2x32xf32> -> vector<2x32xf32>
      %163 = arith.addf %161, %162 : vector<2x32xf32>
      %164 = math.tanh %163 : vector<2x32xf32>
      %165 = arith.index_cast %arg19 : i32 to index
      %c0_194 = arith.constant 0 : index
      %c0_195 = arith.constant 0 : index
      %166 = vector.load %arg16[%165, %c0_194, %c0_195] : memref<8x2x32xf32, #tpu.memory_space<vmem>>, vector<1x2x32xf32>
      %167 = vector.shape_cast %166 : vector<1x2x32xf32> to vector<2x32xf32>
      %cst_196 = arith.constant dense<0.000000e+00> : vector<2x32xf32>
      %168 = tpu.matmul %arg20, %117, %cst_196 {dimension_numbers = #tpu.dot_dimension_numbers<[1], [0], [0], [1], [0, 0, 1, 1], [], []>} : vector<2x32xf32>, vector<32x32xf32>, vector<2x32xf32> -> vector<2x32xf32>
      %169 = arith.addf %167, %168 : vector<2x32xf32>
      %170 = arith.negf %169 : vector<2x32xf32>
      %171 = math.exp %170 : vector<2x32xf32>
      %cst_197 = arith.constant 1.000000e+00 : f32
      %172 = vector.broadcast %cst_197 : f32 to vector<2x32xf32>
      %173 = arith.addf %172, %171 : vector<2x32xf32>
      %174 = arith.divf %172, %173 : vector<2x32xf32>
      %175 = arith.mulf %158, %arg21 : vector<2x32xf32>
      %176 = arith.mulf %148, %164 : vector<2x32xf32>
      %177 = arith.addf %175, %176 : vector<2x32xf32>
      %178 = math.tanh %177 : vector<2x32xf32>
      %179 = arith.mulf %174, %178 : vector<2x32xf32>
      %180 = arith.index_cast %arg19 : i32 to index
      %c0_198 = arith.constant 0 : index
      %c0_199 = arith.constant 0 : index
      %181 = vector.load %arg12[%180, %c0_198, %c0_199] : memref<8x2x32xf32, #tpu.memory_space<vmem>>, vector<1x2x32xf32>
      %182 = vector.shape_cast %181 : vector<1x2x32xf32> to vector<2x32xf32>
      %183 = vector.shape_cast %179 : vector<2x32xf32> to vector<1x2x32xf32>
      tpu.vector_store %arg12[%180, %c0_198, %c0_199], %183 {strides = array<i32>} : memref<8x2x32xf32, #tpu.memory_space<vmem>>, vector<1x2x32xf32>,
      scf.yield %179, %177 : vector<2x32xf32>, vector<2x32xf32>
    }
    %c8_i32_165 = arith.constant 8 : i32
    %c1_166 = arith.constant 1 : index
    %c0_167 = arith.constant 0 : index
    %c0_168 = arith.constant 0 : index
    %124 = vector.load %arg17[%c1_166, %c0_167, %c0_168] : memref<2x2x32xf32, #tpu.memory_space<vmem>>, vector<1x2x32xf32>
    %125 = vector.shape_cast %124 : vector<1x2x32xf32> to vector<2x32xf32>
    %126 = vector.shape_cast %123#0 : vector<2x32xf32> to vector<1x2x32xf32>
    tpu.vector_store %arg17[%c1_166, %c0_167, %c0_168], %126 {strides = array<i32>} : memref<2x2x32xf32, #tpu.memory_space<vmem>>, vector<1x2x32xf32>,
    %c1_169 = arith.constant 1 : index
    %c0_170 = arith.constant 0 : index
    %c0_171 = arith.constant 0 : index
    %127 = vector.load %arg18[%c1_169, %c0_170, %c0_171] : memref<2x2x32xf32, #tpu.memory_space<vmem>>, vector<1x2x32xf32>
    %128 = vector.shape_cast %127 : vector<1x2x32xf32> to vector<2x32xf32>
    %129 = vector.shape_cast %123#1 : vector<2x32xf32> to vector<1x2x32xf32>
    tpu.vector_store %arg18[%c1_169, %c0_170, %c0_171], %129 {strides = array<i32>} : memref<2x2x32xf32, #tpu.memory_space<vmem>>, vector<1x2x32xf32>,
    %c0_172 = arith.constant 0 : index
    %c0_173 = arith.constant 0 : index
    %c0_174 = arith.constant 0 : index
    %130 = vector.load %arg12[%c0_172, %c0_173, %c0_174] : memref<8x2x32xf32, #tpu.memory_space<vmem>>, vector<8x2x32xf32>
    %131 = vector.shape_cast %130 : vector<8x2x32xf32> to vector<16x32xf32>
    %c0_175 = arith.constant 0 : index
    %c0_176 = arith.constant 0 : index
    %132 = vector.load %arg9[%c0_175, %c0_176] : memref<32x6xf32, #tpu.memory_space<vmem>>, vector<32x6xf32>
    %cst_177 = arith.constant dense<0.000000e+00> : vector<16x6xf32>
    %133 = tpu.matmul %131, %132, %cst_177 {dimension_numbers = #tpu.dot_dimension_numbers<[1], [0], [0], [1], [0, 0, 1, 1], [], []>} : vector<16x32xf32>, vector<32x6xf32>, vector<16x6xf32> -> vector<16x6xf32>
    %c0_178 = arith.constant 0 : index
    %c0_179 = arith.constant 0 : index
    %134 = vector.load %arg10[%c0_178, %c0_179] : memref<1x6xf32, #tpu.memory_space<vmem>>, vector<1x6xf32>
    %135 = vector.broadcast %134 : vector<1x6xf32> to vector<16x6xf32>
    %136 = arith.addf %133, %135 : vector<16x6xf32>
    %137 = vector.shape_cast %136 : vector<16x6xf32> to vector<8x2x6xf32>
    %c0_180 = arith.constant 0 : index
    %c0_181 = arith.constant 0 : index
    %c0_182 = arith.constant 0 : index
    %138 = vector.load %arg11[%c0_180, %c0_181, %c0_182] : memref<8x2x6xf32, #tpu.memory_space<vmem>>, vector<8x2x6xf32>
    tpu.vector_store %arg11[%c0_180, %c0_181, %c0_182], %137 {strides = array<i32>} : memref<8x2x6xf32, #tpu.memory_space<vmem>>, vector<8x2x6xf32>,
    return
  }
  func.func @transform_0(%arg0: i32) -> (i32, i32, i32) {
    %c0_i32 = arith.constant 0 : i32
    %c0_i32_0 = arith.constant 0 : i32
    %c0_i32_1 = arith.constant 0 : i32
    return %arg0, %c0_i32, %c0_i32_0 : i32, i32, i32
  }
  func.func @transform_1(%arg0: i32) -> (i32, i32, i32) {
    %c0_i32 = arith.constant 0 : i32
    %c0_i32_0 = arith.constant 0 : i32
    %c0_i32_1 = arith.constant 0 : i32
    %c0_i32_2 = arith.constant 0 : i32
    return %c0_i32, %c0_i32_0, %c0_i32_1 : i32, i32, i32
  }
  func.func @transform_2(%arg0: i32) -> (i32, i32, i32) {
    %c0_i32 = arith.constant 0 : i32
    %c0_i32_0 = arith.constant 0 : i32
    %c0_i32_1 = arith.constant 0 : i32
    %c0_i32_2 = arith.constant 0 : i32
    return %c0_i32, %c0_i32_0, %c0_i32_1 : i32, i32, i32
  }
  func.func @transform_3(%arg0: i32) -> (i32, i32) {
    %c0_i32 = arith.constant 0 : i32
    %c0_i32_0 = arith.constant 0 : i32
    %c0_i32_1 = arith.constant 0 : i32
    return %c0_i32, %c0_i32_0 : i32, i32
  }
  func.func @transform_4(%arg0: i32) -> (i32, i32) {
    %c0_i32 = arith.constant 0 : i32
    %c0_i32_0 = arith.constant 0 : i32
    %c0_i32_1 = arith.constant 0 : i32
    return %c0_i32, %c0_i32_0 : i32, i32
  }
  func.func @transform_5(%arg0: i32) -> (i32, i32, i32, i32) {
    %c0_i32 = arith.constant 0 : i32
    %c0_i32_0 = arith.constant 0 : i32
    %c0_i32_1 = arith.constant 0 : i32
    %c0_i32_2 = arith.constant 0 : i32
    %c0_i32_3 = arith.constant 0 : i32
    return %c0_i32, %c0_i32_0, %c0_i32_1, %c0_i32_2 : i32, i32, i32, i32
  }
  func.func @transform_6(%arg0: i32) -> (i32, i32, i32, i32) {
    %c0_i32 = arith.constant 0 : i32
    %c0_i32_0 = arith.constant 0 : i32
    %c0_i32_1 = arith.constant 0 : i32
    %c0_i32_2 = arith.constant 0 : i32
    %c0_i32_3 = arith.constant 0 : i32
    return %c0_i32, %c0_i32_0, %c0_i32_1, %c0_i32_2 : i32, i32, i32, i32
  }
  func.func @transform_7(%arg0: i32) -> (i32, i32, i32, i32) {
    %c0_i32 = arith.constant 0 : i32
    %c0_i32_0 = arith.constant 0 : i32
    %c0_i32_1 = arith.constant 0 : i32
    %c0_i32_2 = arith.constant 0 : i32
    %c0_i32_3 = arith.constant 0 : i32
    return %c0_i32, %c0_i32_0, %c0_i32_1, %c0_i32_2 : i32, i32, i32, i32
  }
  func.func @transform_8(%arg0: i32) -> (i32, i32) {
    %c0_i32 = arith.constant 0 : i32
    %c0_i32_0 = arith.constant 0 : i32
    %c0_i32_1 = arith.constant 0 : i32
    return %c0_i32, %c0_i32_0 : i32, i32
  }
  func.func @transform_9(%arg0: i32) -> (i32, i32) {
    %c0_i32 = arith.constant 0 : i32
    %c0_i32_0 = arith.constant 0 : i32
    %c0_i32_1 = arith.constant 0 : i32
    return %c0_i32, %c0_i32_0 : i32, i32
  }
  func.func @transform_10(%arg0: i32) -> (i32, i32, i32) {
    %c0_i32 = arith.constant 0 : i32
    %c0_i32_0 = arith.constant 0 : i32
    %c0_i32_1 = arith.constant 0 : i32
    return %arg0, %c0_i32, %c0_i32_0 : i32, i32, i32
  }
}

</mosaic_0001>

<llo_original>
// kernel: tpu_custom_call.1
$region0: #{tpu_custom_call.1}
  #allocation0 [shape = 'u32[]', space=smem, size = 0x4, offset = 0x4, fixed_abs, tag = 'smem constant byte address 0x4 - core index']
  #allocation1 [shape = 'u32[72,128]{1,0:T(1,128)}', space=vmem, size = 0x9000, scoped, tag = 'internal scratch']
  #allocation2 [shape = 'f32[8,2,32]{2,1,0:T(2,128)}', space=vmem, size = 0x2000, scoped, tag = 'scratch operand']
  #allocation3 [shape = 'f32[8,2,32]{2,1,0:T(2,128)}', space=vmem, size = 0x2000, scoped, tag = 'scratch operand']
  #allocation4 [shape = 'f32[8,2,32]{2,1,0:T(2,128)}', space=vmem, size = 0x2000, scoped, tag = 'scratch operand']
  #allocation5 [shape = 'f32[8,2,32]{2,1,0:T(2,128)}', space=vmem, size = 0x2000, scoped, tag = 'scratch operand']
  #allocation6 [shape = 'f32[8,2,32]{2,1,0:T(2,128)}', space=vmem, size = 0x2000, scoped, tag = 'scratch operand']
  #allocation7 [shape = 'f32[2,2,32]{2,1,0:T(2,128)}', space=vmem, size = 0x800, scoped, tag = 'scratch operand']
  #allocation8 [shape = 'f32[2,2,32]{2,1,0:T(2,128)}', space=vmem, size = 0x800, scoped, tag = 'scratch operand']
  %s0 = inlined_call_operand.vmem [shape: f32[8,2,12], index: 0, kind: input, shape index: {}]
  %s1 = inlined_call_operand.hbm [shape: f32[2,2,32], index: 1, kind: input, shape index: {}]
  %s2 = inlined_call_operand.hbm [shape: f32[2,2,32], index: 2, kind: input, shape index: {}]
  %s3 = inlined_call_operand.vmem [shape: f32[12,32], index: 3, kind: input, shape index: {}]
  %s4 = inlined_call_operand.vmem [shape: f32[1,32], index: 4, kind: input, shape index: {}]
  %s5 = inlined_call_operand.hbm [shape: f32[2,4,32,32], index: 5, kind: input, shape index: {}]
  %s6 = inlined_call_operand.hbm [shape: f32[2,4,32,32], index: 6, kind: input, shape index: {}]
  %s7 = inlined_call_operand.vmem [shape: f32[2,4,1,32], index: 7, kind: input, shape index: {}]
  %s8 = inlined_call_operand.vmem [shape: f32[32,6], index: 8, kind: input, shape index: {}]
  %s9 = inlined_call_operand.vmem [shape: f32[1,6], index: 9, kind: input, shape index: {}]
  %s10 = inlined_call_operand.vmem [shape: f32[8,2,6], index: 10, kind: output, shape index: {}]
  %s11 = sld [smem:[#allocation0]]
  $region84: #{tpu_custom_call.1} parent=0
    _
  %s13 = ssub.s32 1, %s11
  %s14 = scalar_select 0, %s13, %s11
  $region1: #{tpu_custom_call.1} parent=0
    #allocation9 [shape = 'u8[2048]{0}', space=vmem, size = 0x800, scoped, tag = 'input window, operand 1, single buffered']
    #allocation10 [shape = 's32[1]{0}', space=sflag, size = 0x4, scoped, tag = 'scoped memory for tpu_custom_call.1']
    #allocation11 [shape = 'u8[2048]{0}', space=vmem, size = 0x800, scoped, tag = 'input window, operand 2, single buffered']
    #allocation12 [shape = 's32[1]{0}', space=sflag, size = 0x4, scoped, tag = 'scoped memory for tpu_custom_call.1']
    #allocation13 [shape = 'u8[131072]{0}', space=vmem, size = 0x20000, scoped, tag = 'input window, operand 5, single buffered']
    #allocation14 [shape = 'u8[131072]{0}', space=vmem, size = 0x20000, scoped, tag = 'input window, operand 6, single buffered']
    #allocation15 [shape = 's32[1]{0}', space=sflag, size = 0x4, scoped, tag = 'scoped memory for tpu_custom_call.1']
    %15 = vsyncpa [#allocation10], 0
    %16 = vsyncpa [#allocation12], 0
    %17 = vsyncpa [#allocation15], 0
    // Predicated region
    $region2: #{tpu_custom_call.1} parent=1 // pred_check
      _
    $region3: #{tpu_custom_call.1} parent=1 // pred_check_branch
      %19 = sbr.rel (0) target = $region5
    $region4: #{tpu_custom_call.1} parent=1 // pred_region
      _
    $region5: #{tpu_custom_call.1} parent=1 // pred_fallthru
      _
    // Predicated region
    $region6: #{tpu_custom_call.1} parent=1 // pred_check
      _
    $region7: #{tpu_custom_call.1} parent=1 // pred_check_branch
      %21 = sbr.rel (0) target = $region9
    $region8: #{tpu_custom_call.1} parent=1 // pred_region
      %23 = vsyncadd [#allocation10], 0
      %s24 = sshll.u32 %s1, 4
      %s25 = int_to_ptr.hbm [resolvable:$true] %s24
      %s26 = sshll.u32 [#allocation9], 4
      %s27 = int_to_ptr.vmem [resolvable:$true] %s26
      %32 = dma.hbm_to_vmem [thread:$0]  %s25, 64, %s27, [#allocation10], 32, 32, 2
    $region9: #{tpu_custom_call.1} parent=1 // pred_fallthru
      _
    // Predicated region
    $region10: #{tpu_custom_call.1} parent=1 // pred_check
      _
    $region11: #{tpu_custom_call.1} parent=1 // pred_check_branch
      %34 = sbr.rel (0) target = $region13
    $region12: #{tpu_custom_call.1} parent=1 // pred_region
      %36 = vsyncadd [#allocation12], 0
      %s37 = sshll.u32 %s2, 4
      %s38 = int_to_ptr.hbm [resolvable:$true] %s37
      %s39 = sshll.u32 [#allocation11], 4
      %s40 = int_to_ptr.vmem [resolvable:$true] %s39
      %45 = dma.hbm_to_vmem [thread:$0]  %s38, 64, %s40, [#allocation12], 32, 32, 2
    $region13: #{tpu_custom_call.1} parent=1 // pred_fallthru
      _
    // Predicated region
    $region14: #{tpu_custom_call.1} parent=1 // pred_check
      _
    $region15: #{tpu_custom_call.1} parent=1 // pred_check_branch
      %47 = sbr.rel (0) target = $region17
    $region16: #{tpu_custom_call.1} parent=1 // pred_region
      _
    $region17: #{tpu_custom_call.1} parent=1 // pred_fallthru
      _
    // Predicated region
    $region18: #{tpu_custom_call.1} parent=1 // pred_check
      _
    $region19: #{tpu_custom_call.1} parent=1 // pred_check_branch
      %49 = sbr.rel (0) target = $region21
    $region20: #{tpu_custom_call.1} parent=1 // pred_region
      _
    $region21: #{tpu_custom_call.1} parent=1 // pred_fallthru
      _
    // Predicated region
    $region22: #{tpu_custom_call.1} parent=1 // pred_check
      _
    $region23: #{tpu_custom_call.1} parent=1 // pred_check_branch
      %51 = sbr.rel (0) target = $region25
    $region24: #{tpu_custom_call.1} parent=1 // pred_region
      %53 = vsyncadd [#allocation12], 0
      %s54 = sshll.u32 %s5, 4
      %s55 = int_to_ptr.hbm [resolvable:$true] %s54
      %s56 = sshll.u32 [#allocation13], 4
      %s57 = int_to_ptr.vmem [resolvable:$true] %s56
      %62 = dma.hbm_to_vmem [thread:$0]  %s55, 4096, %s57, [#allocation12], 128, 128, 8
    $region25: #{tpu_custom_call.1} parent=1 // pred_fallthru
      _
    // Predicated region
    $region26: #{tpu_custom_call.1} parent=1 // pred_check
      _
    $region27: #{tpu_custom_call.1} parent=1 // pred_check_branch
      %64 = sbr.rel (0) target = $region29
    $region28: #{tpu_custom_call.1} parent=1 // pred_region
      %66 = vsyncadd [#allocation15], 0
      %s67 = sshll.u32 %s6, 4
      %s68 = int_to_ptr.hbm [resolvable:$true] %s67
      %s69 = sshll.u32 [#allocation14], 4
      %s70 = int_to_ptr.vmem [resolvable:$true] %s69
      %75 = dma.hbm_to_vmem [thread:$0]  %s68, 4096, %s70, [#allocation15], 128, 128, 8
    $region29: #{tpu_custom_call.1} parent=1 // pred_fallthru
      _
    // Predicated region
    $region30: #{tpu_custom_call.1} parent=1 // pred_check
      _
    $region31: #{tpu_custom_call.1} parent=1 // pred_check_branch
      %77 = sbr.rel (0) target = $region33
    $region32: #{tpu_custom_call.1} parent=1 // pred_region
      _
    $region33: #{tpu_custom_call.1} parent=1 // pred_fallthru
      _
    // Predicated region
    $region34: #{tpu_custom_call.1} parent=1 // pred_check
      _
    $region35: #{tpu_custom_call.1} parent=1 // pred_check_branch
      %79 = sbr.rel (0) target = $region37
    $region36: #{tpu_custom_call.1} parent=1 // pred_region
      _
    $region37: #{tpu_custom_call.1} parent=1 // pred_fallthru
      _
    // Predicated region
    $region38: #{tpu_custom_call.1} parent=1 // pred_check
      _
    $region39: #{tpu_custom_call.1} parent=1 // pred_check_branch
      %81 = sbr.rel (0) target = $region41
    $region40: #{tpu_custom_call.1} parent=1 // pred_region
      _
    $region41: #{tpu_custom_call.1} parent=1 // pred_fallthru
      _
    // Predicated region
    $region42: #{tpu_custom_call.1} parent=1 // pred_check
      _
    $region43: #{tpu_custom_call.1} parent=1 // pred_check_branch
      %83 = sbr.rel (0) target = $region45
    $region44: #{tpu_custom_call.1} parent=1 // pred_region
      %85 = dma.done [#allocation10], 64
    $region45: #{tpu_custom_call.1} parent=1 // pred_fallthru
      _
    // Predicated region
    $region46: #{tpu_custom_call.1} parent=1 // pred_check
      _
    $region47: #{tpu_custom_call.1} parent=1 // pred_check_branch
      %87 = sbr.rel (0) target = $region49
    $region48: #{tpu_custom_call.1} parent=1 // pred_region
      %89 = dma.done [#allocation12], 64
    $region49: #{tpu_custom_call.1} parent=1 // pred_fallthru
      _
    // Predicated region
    $region50: #{tpu_custom_call.1} parent=1 // pred_check
      _
    $region51: #{tpu_custom_call.1} parent=1 // pred_check_branch
      %91 = sbr.rel (0) target = $region53
    $region52: #{tpu_custom_call.1} parent=1 // pred_region
      %93 = dma.done [#allocation12], 4096
    $region53: #{tpu_custom_call.1} parent=1 // pred_fallthru
      _
    // Predicated region
    $region54: #{tpu_custom_call.1} parent=1 // pred_check
      _
    $region55: #{tpu_custom_call.1} parent=1 // pred_check_branch
      %95 = sbr.rel (0) target = $region57
    $region56: #{tpu_custom_call.1} parent=1 // pred_region
      %97 = dma.done [#allocation15], 4096
    $region57: #{tpu_custom_call.1} parent=1 // pred_fallthru
      _
    %p98 = scmp.eq.s32.totalorder 0, 0
    // Predicated region
    $region58: #{tpu_custom_call.1} parent=1 // pred_check
      %p99 = pneg %p98
    $region59: #{tpu_custom_call.1} parent=1 // pred_check_branch
      %101 = sbr.rel (%p99) target = $region61
    $region60: #{tpu_custom_call.1} parent=1 // pred_region
      %v102 = vld [vmem:[#allocation9] sm:$0x3]
      %v103 = vld [vmem:[#allocation9 + $0x2] sm:$0x3]
      %vm104 = vcmask 254976
      %105 = vst.msk [vmem:[#allocation7] sm:$0x3] %vm104, %v102
      %106 = vst.msk [vmem:[#allocation7 + $0x2] sm:$0x3] %vm104, %v103
      %v107 = vld [vmem:[#allocation11] sm:$0x3]
      %v108 = vld [vmem:[#allocation11 + $0x2] sm:$0x3]
      %109 = vst.msk [vmem:[#allocation8] sm:$0x3] %vm104, %v107
      %110 = vst.msk [vmem:[#allocation8 + $0x2] sm:$0x3] %vm104, %v108
    $region61: #{tpu_custom_call.1} parent=1 // pred_fallthru
      _
    %v111 = vld [vmem:[%s0] sm:$0x3]
    %v112 = vld [vmem:[%s0 + $0x2] sm:$0x3]
    %v113 = vld [vmem:[%s0 + $0x4] sm:$0x3]
    %v114 = vld [vmem:[%s0 + $0x6] sm:$0x3]
    %v115 = vld [vmem:[%s0 + $0x8] sm:$0x3]
    %v116 = vld [vmem:[%s0 + $0xa] sm:$0x3]
    %v117 = vld [vmem:[%s0 + $0xc] sm:$0x3]
    %v118 = vld [vmem:[%s0 + $0xe] sm:$0x3]
    %v119 = vld [vmem:[%s3] sm:$0xff]
    %v120 = vld [vmem:[%s3 + $0x8] sm:$0xf]
    %v121 = vld [vmem:[%s4] sm:$0x1]
    %v123 = vperm.slane %v121, 0
    %133 = vst [vmem:[#allocation1] ss:$4 sm:$0xff] %v111
    %s134 = scalar_lea.vmem [#allocation1], 1
    %135 = vst [vmem:[%s134] ss:$4 sm:$0xff] %v112
    %s136 = scalar_lea.vmem [#allocation1], 2
    %137 = vst [vmem:[%s136] ss:$4 sm:$0xff] %v113
    %s138 = scalar_lea.vmem [#allocation1], 3
    %139 = vst [vmem:[%s138] ss:$4 sm:$0xff] %v114
    %s140 = scalar_lea.vmem [#allocation1], 32
    %141 = vst [vmem:[%s140] ss:$4 sm:$0xff] %v115
    %s142 = scalar_lea.vmem [#allocation1], 33
    %143 = vst [vmem:[%s142] ss:$4 sm:$0xff] %v116
    %s144 = scalar_lea.vmem [#allocation1], 34
    %145 = vst [vmem:[%s144] ss:$4 sm:$0xff] %v117
    %s146 = scalar_lea.vmem [#allocation1], 35
    %147 = vst [vmem:[%s146] ss:$4 sm:$0xff] %v118
    %v148 = vld.sshfl [vmem:[#allocation1] sm:$0xff pattern:$0x73625140]
    %v149 = vld.sshfl [vmem:[#allocation1 + $0x20] sm:$0xff pattern:$0x73625140]
    %vm150 = vcmask 97280
    %v151 = vsel %vm150, %v148, 0
    %v153 = vsel %vm150, %v149, 0
    %vm155 = vcmask 1043456
    %v157 = vsel %vm155, %v120, 0
    %159 = vmatpush.msra.mxu0 0.0
    %160 = vmatpush.msra.mxu0 0.0
    %161 = vmatpush.msra.mxu0 0.0
    %162 = vmatpush.msra.mxu0 0.0
    %163 = vmatpush.msra.mxu0 0.0
    %164 = vmatpush.msra.mxu0 0.0
    %165 = vmatpush.msra.mxu0 0.0
    %166 = vmatpush.msra.mxu0 0.0
    %167 = vmatpush.msra.mxu0 0.0
    %168 = vmatpush.msra.mxu0 0.0
    %169 = vmatpush.msra.mxu0 0.0
    %170 = vmatpush.msra.mxu0 0.0
    %171 = vmatpush.msra.mxu0 0.0
    %172 = vmatpush.msra.mxu0 0.0
    %173 = vmatpush.msra.mxu0 %v157
    %174 = vmatpush.msra.mxu0 %v119
    %175 = vmatmul.f32.gmra.mxu0 %v151
    %v176 = vpop.f32.mrf.mxu0
    %v177 = vadd.f32 %v123, %v176
    %178 = vmatmul.f32.gmra.mxu0 %v153
    %v179 = vpop.f32.mrf.mxu0
    %v180 = vadd.f32 %v123, %v179
    %181 = vdwg.mxu0
    %v182 = vmax.f32 %v177, 0.0
    %v183 = vmax.f32 %v180, 0.0
    %v186 = vrot.slane %v182, 2
    %v187 = vrot.slane %v182, 4
    %v188 = vrot.slane %v182, 6
    %v189 = vrot.slane %v183, 2
    %v190 = vrot.slane %v183, 4
    %v191 = vrot.slane %v183, 6
    %vm198 = vcmask 254976
    %199 = vst.msk [vmem:[#allocation2] sm:$0x3] %vm198, %v182
    %200 = vst.msk [vmem:[#allocation2 + $0x2] sm:$0x3] %vm198, %v186
    %201 = vst.msk [vmem:[#allocation2 + $0x4] sm:$0x3] %vm198, %v187
    %202 = vst.msk [vmem:[#allocation2 + $0x6] sm:$0x3] %vm198, %v188
    %203 = vst.msk [vmem:[#allocation2 + $0x8] sm:$0x3] %vm198, %v183
    %204 = vst.msk [vmem:[#allocation2 + $0xa] sm:$0x3] %vm198, %v189
    %205 = vst.msk [vmem:[#allocation2 + $0xc] sm:$0x3] %vm198, %v190
    %206 = vst.msk [vmem:[#allocation2 + $0xe] sm:$0x3] %vm198, %v191
    %v207 = vld [vmem:[#allocation2] sm:$0x3]
    %v208 = vld [vmem:[#allocation2 + $0x2] sm:$0x3]
    %v209 = vld [vmem:[#allocation2 + $0x4] sm:$0x3]
    %v210 = vld [vmem:[#allocation2 + $0x6] sm:$0x3]
    %v211 = vld [vmem:[#allocation2 + $0x8] sm:$0x3]
    %v212 = vld [vmem:[#allocation2 + $0xa] sm:$0x3]
    %v213 = vld [vmem:[#allocation2 + $0xc] sm:$0x3]
    %v214 = vld [vmem:[#allocation2 + $0xe] sm:$0x3]
    %v215 = vld [vmem:[#allocation13] sm:$0xff]
    %v216 = vld [vmem:[#allocation13 + $0x8] sm:$0xff]
    %v217 = vld [vmem:[#allocation13 + $0x10] sm:$0xff]
    %v218 = vld [vmem:[#allocation13 + $0x18] sm:$0xff]
    %v219 = vld [vmem:[%s7] sm:$0x1]
    %v221 = vperm.slane %v219, 0
    %231 = vst [vmem:[#allocation1] ss:$4 sm:$0xff] %v207
    %s232 = scalar_lea.vmem [#allocation1], 1
    %233 = vst [vmem:[%s232] ss:$4 sm:$0xff] %v208
    %s234 = scalar_lea.vmem [#allocation1], 2
    %235 = vst [vmem:[%s234] ss:$4 sm:$0xff] %v209
    %s236 = scalar_lea.vmem [#allocation1], 3
    %237 = vst [vmem:[%s236] ss:$4 sm:$0xff] %v210
    %s238 = scalar_lea.vmem [#allocation1], 32
    %239 = vst [vmem:[%s238] ss:$4 sm:$0xff] %v211
    %s240 = scalar_lea.vmem [#allocation1], 33
    %241 = vst [vmem:[%s240] ss:$4 sm:$0xff] %v212
    %s242 = scalar_lea.vmem [#allocation1], 34
    %243 = vst [vmem:[%s242] ss:$4 sm:$0xff] %v213
    %s244 = scalar_lea.vmem [#allocation1], 35
    %245 = vst [vmem:[%s244] ss:$4 sm:$0xff] %v214
    %v246 = vld.sshfl [vmem:[#allocation1] sm:$0xff pattern:$0x73625140]
    %v247 = vld.sshfl [vmem:[#allocation1 + $0x20] sm:$0xff pattern:$0x73625140]
    %vm248 = vcmask 261120
    %v249 = vsel %vm248, %v246, 0
    %v251 = vsel %vm248, %v247, 0
    %253 = vmatpush.msra.mxu0 0.0
    %254 = vmatpush.msra.mxu0 0.0
    %255 = vmatpush.msra.mxu0 0.0
    %256 = vmatpush.msra.mxu0 0.0
    %257 = vmatpush.msra.mxu0 0.0
    %258 = vmatpush.msra.mxu0 0.0
    %259 = vmatpush.msra.mxu0 0.0
    %260 = vmatpush.msra.mxu0 0.0
    %261 = vmatpush.msra.mxu0 0.0
    %262 = vmatpush.msra.mxu0 0.0
    %263 = vmatpush.msra.mxu0 0.0
    %264 = vmatpush.msra.mxu0 0.0
    %265 = vmatpush.msra.mxu0 %v218
    %266 = vmatpush.msra.mxu0 %v217
    %267 = vmatpush.msra.mxu0 %v216
    %268 = vmatpush.msra.mxu0 %v215
    %269 = vmatmul.f32.gmra.mxu0 %v249
    %v270 = vpop.f32.mrf.mxu0
    %v271 = vadd.f32 %v221, %v270
    %272 = vmatmul.f32.gmra.mxu0 %v251
    %v273 = vpop.f32.mrf.mxu0
    %v274 = vadd.f32 %v221, %v273
    %275 = vdwg.mxu0
    %v278 = vrot.slane %v271, 2
    %v279 = vrot.slane %v271, 4
    %v280 = vrot.slane %v271, 6
    %v281 = vrot.slane %v274, 2
    %v282 = vrot.slane %v274, 4
    %v283 = vrot.slane %v274, 6
    %290 = vst.msk [vmem:[#allocation3] sm:$0x3] %vm198, %v271
    %291 = vst.msk [vmem:[#allocation3 + $0x2] sm:$0x3] %vm198, %v278
    %292 = vst.msk [vmem:[#allocation3 + $0x4] sm:$0x3] %vm198, %v279
    %293 = vst.msk [vmem:[#allocation3 + $0x6] sm:$0x3] %vm198, %v280
    %294 = vst.msk [vmem:[#allocation3 + $0x8] sm:$0x3] %vm198, %v274
    %295 = vst.msk [vmem:[#allocation3 + $0xa] sm:$0x3] %vm198, %v281
    %296 = vst.msk [vmem:[#allocation3 + $0xc] sm:$0x3] %vm198, %v282
    %297 = vst.msk [vmem:[#allocation3 + $0xe] sm:$0x3] %vm198, %v283
    %s298 = scalar_lea.vmem [#allocation13], 32
    %v299 = vld [vmem:[%s298] sm:$0xff]
    %v300 = vld [vmem:[%s298 + $0x8] sm:$0xff]
    %v301 = vld [vmem:[%s298 + $0x10] sm:$0xff]
    %v302 = vld [vmem:[%s298 + $0x18] sm:$0xff]
    %s303 = scalar_lea.vmem %s7, 1
    %v304 = vld [vmem:[%s303] sm:$0x1]
    %v306 = vperm.slane %v304, 0
    %308 = vst [vmem:[#allocation1] ss:$4 sm:$0xff] %v207
    %s309 = scalar_lea.vmem [#allocation1], 1
    %310 = vst [vmem:[%s309] ss:$4 sm:$0xff] %v208
    %s311 = scalar_lea.vmem [#allocation1], 2
    %312 = vst [vmem:[%s311] ss:$4 sm:$0xff] %v209
    %s313 = scalar_lea.vmem [#allocation1], 3
    %314 = vst [vmem:[%s313] ss:$4 sm:$0xff] %v210
    %s315 = scalar_lea.vmem [#allocation1], 32
    %316 = vst [vmem:[%s315] ss:$4 sm:$0xff] %v211
    %s317 = scalar_lea.vmem [#allocation1], 33
    %318 = vst [vmem:[%s317] ss:$4 sm:$0xff] %v212
    %s319 = scalar_lea.vmem [#allocation1], 34
    %320 = vst [vmem:[%s319] ss:$4 sm:$0xff] %v213
    %s321 = scalar_lea.vmem [#allocation1], 35
    %322 = vst [vmem:[%s321] ss:$4 sm:$0xff] %v214
    %v323 = vld.sshfl [vmem:[#allocation1] sm:$0xff pattern:$0x73625140]
    %v324 = vld.sshfl [vmem:[#allocation1 + $0x20] sm:$0xff pattern:$0x73625140]
    %v325 = vsel %vm248, %v323, 0
    %v327 = vsel %vm248, %v324, 0
    %329 = vmatpush.msra.mxu0 0.0
    %330 = vmatpush.msra.mxu0 0.0
    %331 = vmatpush.msra.mxu0 0.0
    %332 = vmatpush.msra.mxu0 0.0
    %333 = vmatpush.msra.mxu0 0.0
    %334 = vmatpush.msra.mxu0 0.0
    %335 = vmatpush.msra.mxu0 0.0
    %336 = vmatpush.msra.mxu0 0.0
    %337 = vmatpush.msra.mxu0 0.0
    %338 = vmatpush.msra.mxu0 0.0
    %339 = vmatpush.msra.mxu0 0.0
    %340 = vmatpush.msra.mxu0 0.0
    %341 = vmatpush.msra.mxu0 %v302
    %342 = vmatpush.msra.mxu0 %v301
    %343 = vmatpush.msra.mxu0 %v300
    %344 = vmatpush.msra.mxu0 %v299
    %345 = vmatmul.f32.gmra.mxu0 %v325
    %v346 = vpop.f32.mrf.mxu0
    %v347 = vadd.f32 %v306, %v346
    %348 = vmatmul.f32.gmra.mxu0 %v327
    %v349 = vpop.f32.mrf.mxu0
    %v350 = vadd.f32 %v306, %v349
    %351 = vdwg.mxu0
    %v354 = vrot.slane %v347, 2
    %v355 = vrot.slane %v347, 4
    %v356 = vrot.slane %v347, 6
    %v357 = vrot.slane %v350, 2
    %v358 = vrot.slane %v350, 4
    %v359 = vrot.slane %v350, 6
    %366 = vst.msk [vmem:[#allocation4] sm:$0x3] %vm198, %v347
    %367 = vst.msk [vmem:[#allocation4 + $0x2] sm:$0x3] %vm198, %v354
    %368 = vst.msk [vmem:[#allocation4 + $0x4] sm:$0x3] %vm198, %v355
    %369 = vst.msk [vmem:[#allocation4 + $0x6] sm:$0x3] %vm198, %v356
    %370 = vst.msk [vmem:[#allocation4 + $0x8] sm:$0x3] %vm198, %v350
    %371 = vst.msk [vmem:[#allocation4 + $0xa] sm:$0x3] %vm198, %v357
    %372 = vst.msk [vmem:[#allocation4 + $0xc] sm:$0x3] %vm198, %v358
    %373 = vst.msk [vmem:[#allocation4 + $0xe] sm:$0x3] %vm198, %v359
    %s374 = scalar_lea.vmem [#allocation13], 64
    %v375 = vld [vmem:[%s374] sm:$0xff]
    %v376 = vld [vmem:[%s374 + $0x8] sm:$0xff]
    %v377 = vld [vmem:[%s374 + $0x10] sm:$0xff]
    %v378 = vld [vmem:[%s374 + $0x18] sm:$0xff]
    %s379 = scalar_lea.vmem %s7, 2
    %v380 = vld [vmem:[%s379] sm:$0x1]
    %v382 = vperm.slane %v380, 0
    %384 = vst [vmem:[#allocation1] ss:$4 sm:$0xff] %v207
    %s385 = scalar_lea.vmem [#allocation1], 1
    %386 = vst [vmem:[%s385] ss:$4 sm:$0xff] %v208
    %s387 = scalar_lea.vmem [#allocation1], 2
    %388 = vst [vmem:[%s387] ss:$4 sm:$0xff] %v209
    %s389 = scalar_lea.vmem [#allocation1], 3
    %390 = vst [vmem:[%s389] ss:$4 sm:$0xff] %v210
    %s391 = scalar_lea.vmem [#allocation1], 32
    %392 = vst [vmem:[%s391] ss:$4 sm:$0xff] %v211
    %s393 = scalar_lea.vmem [#allocation1], 33
    %394 = vst [vmem:[%s393] ss:$4 sm:$0xff] %v212
    %s395 = scalar_lea.vmem [#allocation1], 34
    %396 = vst [vmem:[%s395] ss:$4 sm:$0xff] %v213
    %s397 = scalar_lea.vmem [#allocation1], 35
    %398 = vst [vmem:[%s397] ss:$4 sm:$0xff] %v214
    %v399 = vld.sshfl [vmem:[#allocation1] sm:$0xff pattern:$0x73625140]
    %v400 = vld.sshfl [vmem:[#allocation1 + $0x20] sm:$0xff pattern:$0x73625140]
    %v401 = vsel %vm248, %v399, 0
    %v403 = vsel %vm248, %v400, 0
    %405 = vmatpush.msra.mxu0 0.0
    %406 = vmatpush.msra.mxu0 0.0
    %407 = vmatpush.msra.mxu0 0.0
    %408 = vmatpush.msra.mxu0 0.0
    %409 = vmatpush.msra.mxu0 0.0
    %410 = vmatpush.msra.mxu0 0.0
    %411 = vmatpush.msra.mxu0 0.0
    %412 = vmatpush.msra.mxu0 0.0
    %413 = vmatpush.msra.mxu0 0.0
    %414 = vmatpush.msra.mxu0 0.0
    %415 = vmatpush.msra.mxu0 0.0
    %416 = vmatpush.msra.mxu0 0.0
    %417 = vmatpush.msra.mxu0 %v378
    %418 = vmatpush.msra.mxu0 %v377
    %419 = vmatpush.msra.mxu0 %v376
    %420 = vmatpush.msra.mxu0 %v375
    %421 = vmatmul.f32.gmra.mxu0 %v401
    %v422 = vpop.f32.mrf.mxu0
    %v423 = vadd.f32 %v382, %v422
    %424 = vmatmul.f32.gmra.mxu0 %v403
    %v425 = vpop.f32.mrf.mxu0
    %v426 = vadd.f32 %v382, %v425
    %427 = vdwg.mxu0
    %v430 = vrot.slane %v423, 2
    %v431 = vrot.slane %v423, 4
    %v432 = vrot.slane %v423, 6
    %v433 = vrot.slane %v426, 2
    %v434 = vrot.slane %v426, 4
    %v435 = vrot.slane %v426, 6
    %442 = vst.msk [vmem:[#allocation5] sm:$0x3] %vm198, %v423
    %443 = vst.msk [vmem:[#allocation5 + $0x2] sm:$0x3] %vm198, %v430
    %444 = vst.msk [vmem:[#allocation5 + $0x4] sm:$0x3] %vm198, %v431
    %445 = vst.msk [vmem:[#allocation5 + $0x6] sm:$0x3] %vm198, %v432
    %446 = vst.msk [vmem:[#allocation5 + $0x8] sm:$0x3] %vm198, %v426
    %447 = vst.msk [vmem:[#allocation5 + $0xa] sm:$0x3] %vm198, %v433
    %448 = vst.msk [vmem:[#allocation5 + $0xc] sm:$0x3] %vm198, %v434
    %449 = vst.msk [vmem:[#allocation5 + $0xe] sm:$0x3] %vm198, %v435
    %s450 = scalar_lea.vmem [#allocation13], 96
    %v451 = vld [vmem:[%s450] sm:$0xff]
    %v452 = vld [vmem:[%s450 + $0x8] sm:$0xff]
    %v453 = vld [vmem:[%s450 + $0x10] sm:$0xff]
    %v454 = vld [vmem:[%s450 + $0x18] sm:$0xff]
    %s455 = scalar_lea.vmem %s7, 3
    %v456 = vld [vmem:[%s455] sm:$0x1]
    %v458 = vperm.slane %v456, 0
    %460 = vst [vmem:[#allocation1] ss:$4 sm:$0xff] %v207
    %s461 = scalar_lea.vmem [#allocation1], 1
    %462 = vst [vmem:[%s461] ss:$4 sm:$0xff] %v208
    %s463 = scalar_lea.vmem [#allocation1], 2
    %464 = vst [vmem:[%s463] ss:$4 sm:$0xff] %v209
    %s465 = scalar_lea.vmem [#allocation1], 3
    %466 = vst [vmem:[%s465] ss:$4 sm:$0xff] %v210
    %s467 = scalar_lea.vmem [#allocation1], 32
    %468 = vst [vmem:[%s467] ss:$4 sm:$0xff] %v211
    %s469 = scalar_lea.vmem [#allocation1], 33
    %470 = vst [vmem:[%s469] ss:$4 sm:$0xff] %v212
    %s471 = scalar_lea.vmem [#allocation1], 34
    %472 = vst [vmem:[%s471] ss:$4 sm:$0xff] %v213
    %s473 = scalar_lea.vmem [#allocation1], 35
    %474 = vst [vmem:[%s473] ss:$4 sm:$0xff] %v214
    %v475 = vld.sshfl [vmem:[#allocation1] sm:$0xff pattern:$0x73625140]
    %v476 = vld.sshfl [vmem:[#allocation1 + $0x20] sm:$0xff pattern:$0x73625140]
    %v477 = vsel %vm248, %v475, 0
    %v479 = vsel %vm248, %v476, 0
    %481 = vmatpush.msra.mxu0 0.0
    %482 = vmatpush.msra.mxu0 0.0
    %483 = vmatpush.msra.mxu0 0.0
    %484 = vmatpush.msra.mxu0 0.0
    %485 = vmatpush.msra.mxu0 0.0
    %486 = vmatpush.msra.mxu0 0.0
    %487 = vmatpush.msra.mxu0 0.0
    %488 = vmatpush.msra.mxu0 0.0
    %489 = vmatpush.msra.mxu0 0.0
    %490 = vmatpush.msra.mxu0 0.0
    %491 = vmatpush.msra.mxu0 0.0
    %492 = vmatpush.msra.mxu0 0.0
    %493 = vmatpush.msra.mxu0 %v454
    %494 = vmatpush.msra.mxu0 %v453
    %495 = vmatpush.msra.mxu0 %v452
    %496 = vmatpush.msra.mxu0 %v451
    %497 = vmatmul.f32.gmra.mxu0 %v477
    %v498 = vpop.f32.mrf.mxu0
    %v499 = vadd.f32 %v458, %v498
    %500 = vmatmul.f32.gmra.mxu0 %v479
    %v501 = vpop.f32.mrf.mxu0
    %v502 = vadd.f32 %v458, %v501
    %503 = vdwg.mxu0
    %v506 = vrot.slane %v499, 2
    %v507 = vrot.slane %v499, 4
    %v508 = vrot.slane %v499, 6
    %v509 = vrot.slane %v502, 2
    %v510 = vrot.slane %v502, 4
    %v511 = vrot.slane %v502, 6
    %518 = vst.msk [vmem:[#allocation6] sm:$0x3] %vm198, %v499
    %519 = vst.msk [vmem:[#allocation6 + $0x2] sm:$0x3] %vm198, %v506
    %520 = vst.msk [vmem:[#allocation6 + $0x4] sm:$0x3] %vm198, %v507
    %521 = vst.msk [vmem:[#allocation6 + $0x6] sm:$0x3] %vm198, %v508
    %522 = vst.msk [vmem:[#allocation6 + $0x8] sm:$0x3] %vm198, %v502
    %523 = vst.msk [vmem:[#allocation6 + $0xa] sm:$0x3] %vm198, %v509
    %524 = vst.msk [vmem:[#allocation6 + $0xc] sm:$0x3] %vm198, %v510
    %525 = vst.msk [vmem:[#allocation6 + $0xe] sm:$0x3] %vm198, %v511
    %v526 = vld [vmem:[#allocation14] sm:$0xff]
    %v527 = vld [vmem:[#allocation14 + $0x8] sm:$0xff]
    %v528 = vld [vmem:[#allocation14 + $0x10] sm:$0xff]
    %v529 = vld [vmem:[#allocation14 + $0x18] sm:$0xff]
    %s530 = scalar_lea.vmem [#allocation14], 32
    %v531 = vld [vmem:[%s530] sm:$0xff]
    %v532 = vld [vmem:[%s530 + $0x8] sm:$0xff]
    %v533 = vld [vmem:[%s530 + $0x10] sm:$0xff]
    %v534 = vld [vmem:[%s530 + $0x18] sm:$0xff]
    %s535 = scalar_lea.vmem [#allocation14], 64
    %v536 = vld [vmem:[%s535] sm:$0xff]
    %v537 = vld [vmem:[%s535 + $0x8] sm:$0xff]
    %v538 = vld [vmem:[%s535 + $0x10] sm:$0xff]
    %v539 = vld [vmem:[%s535 + $0x18] sm:$0xff]
    %s540 = scalar_lea.vmem [#allocation14], 96
    %v541 = vld [vmem:[%s540] sm:$0xff]
    %v542 = vld [vmem:[%s540 + $0x8] sm:$0xff]
    %v543 = vld [vmem:[%s540 + $0x10] sm:$0xff]
    %v544 = vld [vmem:[%s540 + $0x18] sm:$0xff]
    %v545 = vld [vmem:[#allocation7] sm:$0x3]
    %v546 = vld [vmem:[#allocation8] sm:$0x3]
    loop: start=0, step=1, limit=8
    $region62: #{tpu_custom_call.1} parent=1 // loop_pre_header
      _
    $region63: #{tpu_custom_call.1} parent=1 // loop_header
      %s548 = sphi 0, %s552
      %p549 = scmp.ge.s32.totalorder %s548, 8
      %v553 = vphi %v545, %v713
      %v554 = vphi %v546, %v711
    $region64: #{tpu_custom_call.1} parent=1 // loop_header_branch
      %551 = sbr.rel (%p549) target = $region68
    $region65: #{tpu_custom_call.1} parent=1 // loop_body
      %s555 = smul.u32 %s548, 2
      %s556 = scalar_lea.vmem [#allocation3], %s555
      %v557 = vld [vmem:[%s556] sm:$0x3]
      %v559 = vsel %vm248, %v553, 0
      %561 = vmatpush.msra.mxu0 0.0
      %562 = vmatpush.msra.mxu0 0.0
      %563 = vmatpush.msra.mxu0 0.0
      %564 = vmatpush.msra.mxu0 0.0
      %565 = vmatpush.msra.mxu0 0.0
      %566 = vmatpush.msra.mxu0 0.0
      %567 = vmatpush.msra.mxu0 0.0
      %568 = vmatpush.msra.mxu0 0.0
      %569 = vmatpush.msra.mxu0 0.0
      %570 = vmatpush.msra.mxu0 0.0
      %571 = vmatpush.msra.mxu0 0.0
      %572 = vmatpush.msra.mxu0 0.0
      %573 = vmatpush.msra.mxu0 %v529
      %574 = vmatpush.msra.mxu0 %v528
      %575 = vmatpush.msra.mxu0 %v527
      %576 = vmatpush.msra.mxu0 %v526
      %577 = vmatmul.f32.gmra.mxu0 %v559
      %v578 = vpop.f32.mrf.mxu0
      %v579 = vadd.f32 0.0, %v578
      %580 = vdwg.mxu0
      %v581 = vadd.f32 %v557, %v579
      %v582 = vxor.u32 %v581, 2147483648
      %v583 = vmul.f32 %v582, 1.442695
      %v584 = vpow.pop %v583
      %v585 = vadd.f32 %v584, 1.0
      %v586 = vrcp.pop %v585
      %v587 = vmul.f32 %v585, %v586
      %v588 = vsub.f32 1.0, %v587
      %v589 = vmul.f32 %v586, %v588
      %v590 = vadd.f32 %v586, %v589
      %vm591 = vweird.f32 %v585
      %vm592 = vweird.f32 %v586
      %vm593 = vmor %vm591, %vm592
      %v594 = vsel %vm593, %v586, %v590
      %v595 = vand.u32 2147483647, %v585
      %vm596 = vcmp.eq.f32.partialorder %v595, 8.507059e+37
      %v597 = vand.u32 %v585, 2147483648
      %v598 = vor.u32 1.1754944e-38, %v597
      %v599 = vsel %vm596, %v598, %v594
      %v600 = vmul.f32 1.0, %v599
      %s601 = scalar_lea.vmem [#allocation4], %s555
      %v602 = vld [vmem:[%s601] sm:$0x3]
      %603 = vmatpush.msra.mxu0 0.0
      %604 = vmatpush.msra.mxu0 0.0
      %605 = vmatpush.msra.mxu0 0.0
      %606 = vmatpush.msra.mxu0 0.0
      %607 = vmatpush.msra.mxu0 0.0
      %608 = vmatpush.msra.mxu0 0.0
      %609 = vmatpush.msra.mxu0 0.0
      %610 = vmatpush.msra.mxu0 0.0
      %611 = vmatpush.msra.mxu0 0.0
      %612 = vmatpush.msra.mxu0 0.0
      %613 = vmatpush.msra.mxu0 0.0
      %614 = vmatpush.msra.mxu0 0.0
      %615 = vmatpush.msra.mxu0 %v534
      %616 = vmatpush.msra.mxu0 %v533
      %617 = vmatpush.msra.mxu0 %v532
      %618 = vmatpush.msra.mxu0 %v531
      %619 = vmatmul.f32.gmra.mxu0 %v559
      %v620 = vpop.f32.mrf.mxu0
      %v621 = vadd.f32 0.0, %v620
      %622 = vdwg.mxu0
      %v623 = vadd.f32 %v602, %v621
      %v624 = vxor.u32 %v623, 2147483648
      %v625 = vmul.f32 %v624, 1.442695
      %v626 = vpow.pop %v625
      %v627 = vadd.f32 %v626, 1.0
      %v628 = vrcp.pop %v627
      %v629 = vmul.f32 %v627, %v628
      %v630 = vsub.f32 1.0, %v629
      %v631 = vmul.f32 %v628, %v630
      %v632 = vadd.f32 %v628, %v631
      %vm633 = vweird.f32 %v627
      %vm634 = vweird.f32 %v628
      %vm635 = vmor %vm633, %vm634
      %v636 = vsel %vm635, %v628, %v632
      %v637 = vand.u32 2147483647, %v627
      %vm638 = vcmp.eq.f32.partialorder %v637, 8.507059e+37
      %v639 = vand.u32 %v627, 2147483648
      %v640 = vor.u32 1.1754944e-38, %v639
      %v641 = vsel %vm638, %v640, %v636
      %v642 = vmul.f32 1.0, %v641
      %s643 = scalar_lea.vmem [#allocation5], %s555
      %v644 = vld [vmem:[%s643] sm:$0x3]
      %645 = vmatpush.msra.mxu0 0.0
      %646 = vmatpush.msra.mxu0 0.0
      %647 = vmatpush.msra.mxu0 0.0
      %648 = vmatpush.msra.mxu0 0.0
      %649 = vmatpush.msra.mxu0 0.0
      %650 = vmatpush.msra.mxu0 0.0
      %651 = vmatpush.msra.mxu0 0.0
      %652 = vmatpush.msra.mxu0 0.0
      %653 = vmatpush.msra.mxu0 0.0
      %654 = vmatpush.msra.mxu0 0.0
      %655 = vmatpush.msra.mxu0 0.0
      %656 = vmatpush.msra.mxu0 0.0
      %657 = vmatpush.msra.mxu0 %v539
      %658 = vmatpush.msra.mxu0 %v538
      %659 = vmatpush.msra.mxu0 %v537
      %660 = vmatpush.msra.mxu0 %v536
      %661 = vmatmul.f32.gmra.mxu0 %v559
      %v662 = vpop.f32.mrf.mxu0
      %v663 = vadd.f32 0.0, %v662
      %664 = vdwg.mxu0
      %v665 = vadd.f32 %v644, %v663
      %v666 = vtanh.pop %v665
      %s667 = scalar_lea.vmem [#allocation6], %s555
      %v668 = vld [vmem:[%s667] sm:$0x3]
      %669 = vmatpush.msra.mxu0 0.0
      %670 = vmatpush.msra.mxu0 0.0
      %671 = vmatpush.msra.mxu0 0.0
      %672 = vmatpush.msra.mxu0 0.0
      %673 = vmatpush.msra.mxu0 0.0
      %674 = vmatpush.msra.mxu0 0.0
      %675 = vmatpush.msra.mxu0 0.0
      %676 = vmatpush.msra.mxu0 0.0
      %677 = vmatpush.msra.mxu0 0.0
      %678 = vmatpush.msra.mxu0 0.0
      %679 = vmatpush.msra.mxu0 0.0
      %680 = vmatpush.msra.mxu0 0.0
      %681 = vmatpush.msra.mxu0 %v544
      %682 = vmatpush.msra.mxu0 %v543
      %683 = vmatpush.msra.mxu0 %v542
      %684 = vmatpush.msra.mxu0 %v541
      %685 = vmatmul.f32.gmra.mxu0 %v559
      %v686 = vpop.f32.mrf.mxu0
      %v687 = vadd.f32 0.0, %v686
      %688 = vdwg.mxu0
      %v689 = vadd.f32 %v668, %v687
      %v690 = vxor.u32 %v689, 2147483648
      %v691 = vmul.f32 %v690, 1.442695
      %v692 = vpow.pop %v691
      %v693 = vadd.f32 %v692, 1.0
      %v694 = vrcp.pop %v693
      %v695 = vmul.f32 %v693, %v694
      %v696 = vsub.f32 1.0, %v695
      %v697 = vmul.f32 %v694, %v696
      %v698 = vadd.f32 %v694, %v697
      %vm699 = vweird.f32 %v693
      %vm700 = vweird.f32 %v694
      %vm701 = vmor %vm699, %vm700
      %v702 = vsel %vm701, %v694, %v698
      %v703 = vand.u32 2147483647, %v693
      %vm704 = vcmp.eq.f32.partialorder %v703, 8.507059e+37
      %v705 = vand.u32 %v693, 2147483648
      %v706 = vor.u32 1.1754944e-38, %v705
      %v707 = vsel %vm704, %v706, %v702
      %v708 = vmul.f32 1.0, %v707
      %v709 = vmul.f32 %v642, %v554
      %v710 = vmul.f32 %v600, %v666
      %v711 = vadd.f32 %v709, %v710
      %v712 = vtanh.pop %v711
      %v713 = vmul.f32 %v708, %v712
      %s714 = scalar_lea.vmem [#allocation2], %s555
      %715 = vst.msk [vmem:[%s714] sm:$0x3] %vm198, %v713
    $region66: #{tpu_custom_call.1} parent=1 // loop_footer
      %s552 = sadd.s32 1, %s548
    $region67: #{tpu_custom_call.1} parent=1 // loop_footer_branch
      %547 = sbr.rel target = $region63
    $region68: #{tpu_custom_call.1} parent=1 // loop_exit
      _
    %716 = vst.msk [vmem:[#allocation7] sm:$0x3] %vm198, %v553
    %717 = vst.msk [vmem:[#allocation8] sm:$0x3] %vm198, %v554
    %v718 = vld [vmem:[#allocation2] sm:$0x3]
    %v719 = vld [vmem:[#allocation2 + $0x2] sm:$0x3]
    %v720 = vld [vmem:[#allocation2 + $0x4] sm:$0x3]
    %v721 = vld [vmem:[#allocation2 + $0x6] sm:$0x3]
    %v722 = vld [vmem:[#allocation2 + $0x8] sm:$0x3]
    %v723 = vld [vmem:[#allocation2 + $0xa] sm:$0x3]
    %v724 = vld [vmem:[#allocation2 + $0xc] sm:$0x3]
    %v725 = vld [vmem:[#allocation2 + $0xe] sm:$0x3]
    %s726 = scalar_lea.vmem [#allocation13], 128
    %v727 = vld [vmem:[%s726] sm:$0xff]
    %v728 = vld [vmem:[%s726 + $0x8] sm:$0xff]
    %v729 = vld [vmem:[%s726 + $0x10] sm:$0xff]
    %v730 = vld [vmem:[%s726 + $0x18] sm:$0xff]
    %s731 = scalar_lea.vmem %s7, 4
    %v732 = vld [vmem:[%s731] sm:$0x1]
    %v734 = vperm.slane %v732, 0
    %744 = vst [vmem:[#allocation1] ss:$4 sm:$0xff] %v718
    %s745 = scalar_lea.vmem [#allocation1], 1
    %746 = vst [vmem:[%s745] ss:$4 sm:$0xff] %v719
    %s747 = scalar_lea.vmem [#allocation1], 2
    %748 = vst [vmem:[%s747] ss:$4 sm:$0xff] %v720
    %s749 = scalar_lea.vmem [#allocation1], 3
    %750 = vst [vmem:[%s749] ss:$4 sm:$0xff] %v721
    %s751 = scalar_lea.vmem [#allocation1], 32
    %752 = vst [vmem:[%s751] ss:$4 sm:$0xff] %v722
    %s753 = scalar_lea.vmem [#allocation1], 33
    %754 = vst [vmem:[%s753] ss:$4 sm:$0xff] %v723
    %s755 = scalar_lea.vmem [#allocation1], 34
    %756 = vst [vmem:[%s755] ss:$4 sm:$0xff] %v724
    %s757 = scalar_lea.vmem [#allocation1], 35
    %758 = vst [vmem:[%s757] ss:$4 sm:$0xff] %v725
    %v759 = vld.sshfl [vmem:[#allocation1] sm:$0xff pattern:$0x73625140]
    %v760 = vld.sshfl [vmem:[#allocation1 + $0x20] sm:$0xff pattern:$0x73625140]
    %v761 = vsel %vm248, %v759, 0
    %v763 = vsel %vm248, %v760, 0
    %765 = vmatpush.msra.mxu0 0.0
    %766 = vmatpush.msra.mxu0 0.0
    %767 = vmatpush.msra.mxu0 0.0
    %768 = vmatpush.msra.mxu0 0.0
    %769 = vmatpush.msra.mxu0 0.0
    %770 = vmatpush.msra.mxu0 0.0
    %771 = vmatpush.msra.mxu0 0.0
    %772 = vmatpush.msra.mxu0 0.0
    %773 = vmatpush.msra.mxu0 0.0
    %774 = vmatpush.msra.mxu0 0.0
    %775 = vmatpush.msra.mxu0 0.0
    %776 = vmatpush.msra.mxu0 0.0
    %777 = vmatpush.msra.mxu0 %v730
    %778 = vmatpush.msra.mxu0 %v729
    %779 = vmatpush.msra.mxu0 %v728
    %780 = vmatpush.msra.mxu0 %v727
    %781 = vmatmul.f32.gmra.mxu0 %v761
    %v782 = vpop.f32.mrf.mxu0
    %v783 = vadd.f32 %v734, %v782
    %784 = vmatmul.f32.gmra.mxu0 %v763
    %v785 = vpop.f32.mrf.mxu0
    %v786 = vadd.f32 %v734, %v785
    %787 = vdwg.mxu0
    %v790 = vrot.slane %v783, 2
    %v791 = vrot.slane %v783, 4
    %v792 = vrot.slane %v783, 6
    %v793 = vrot.slane %v786, 2
    %v794 = vrot.slane %v786, 4
    %v795 = vrot.slane %v786, 6
    %802 = vst.msk [vmem:[#allocation3] sm:$0x3] %vm198, %v783
    %803 = vst.msk [vmem:[#allocation3 + $0x2] sm:$0x3] %vm198, %v790
    %804 = vst.msk [vmem:[#allocation3 + $0x4] sm:$0x3] %vm198, %v791
    %805 = vst.msk [vmem:[#allocation3 + $0x6] sm:$0x3] %vm198, %v792
    %806 = vst.msk [vmem:[#allocation3 + $0x8] sm:$0x3] %vm198, %v786
    %807 = vst.msk [vmem:[#allocation3 + $0xa] sm:$0x3] %vm198, %v793
    %808 = vst.msk [vmem:[#allocation3 + $0xc] sm:$0x3] %vm198, %v794
    %809 = vst.msk [vmem:[#allocation3 + $0xe] sm:$0x3] %vm198, %v795
    %s810 = scalar_lea.vmem [#allocation13], 160
    %v811 = vld [vmem:[%s810] sm:$0xff]
    %v812 = vld [vmem:[%s810 + $0x8] sm:$0xff]
    %v813 = vld [vmem:[%s810 + $0x10] sm:$0xff]
    %v814 = vld [vmem:[%s810 + $0x18] sm:$0xff]
    %s815 = scalar_lea.vmem %s7, 5
    %v816 = vld [vmem:[%s815] sm:$0x1]
    %v818 = vperm.slane %v816, 0
    %820 = vst [vmem:[#allocation1] ss:$4 sm:$0xff] %v718
    %s821 = scalar_lea.vmem [#allocation1], 1
    %822 = vst [vmem:[%s821] ss:$4 sm:$0xff] %v719
    %s823 = scalar_lea.vmem [#allocation1], 2
    %824 = vst [vmem:[%s823] ss:$4 sm:$0xff] %v720
    %s825 = scalar_lea.vmem [#allocation1], 3
    %826 = vst [vmem:[%s825] ss:$4 sm:$0xff] %v721
    %s827 = scalar_lea.vmem [#allocation1], 32
    %828 = vst [vmem:[%s827] ss:$4 sm:$0xff] %v722
    %s829 = scalar_lea.vmem [#allocation1], 33
    %830 = vst [vmem:[%s829] ss:$4 sm:$0xff] %v723
    %s831 = scalar_lea.vmem [#allocation1], 34
    %832 = vst [vmem:[%s831] ss:$4 sm:$0xff] %v724
    %s833 = scalar_lea.vmem [#allocation1], 35
    %834 = vst [vmem:[%s833] ss:$4 sm:$0xff] %v725
    %v835 = vld.sshfl [vmem:[#allocation1] sm:$0xff pattern:$0x73625140]
    %v836 = vld.sshfl [vmem:[#allocation1 + $0x20] sm:$0xff pattern:$0x73625140]
    %v837 = vsel %vm248, %v835, 0
    %v839 = vsel %vm248, %v836, 0
    %841 = vmatpush.msra.mxu0 0.0
    %842 = vmatpush.msra.mxu0 0.0
    %843 = vmatpush.msra.mxu0 0.0
    %844 = vmatpush.msra.mxu0 0.0
    %845 = vmatpush.msra.mxu0 0.0
    %846 = vmatpush.msra.mxu0 0.0
    %847 = vmatpush.msra.mxu0 0.0
    %848 = vmatpush.msra.mxu0 0.0
    %849 = vmatpush.msra.mxu0 0.0
    %850 = vmatpush.msra.mxu0 0.0
    %851 = vmatpush.msra.mxu0 0.0
    %852 = vmatpush.msra.mxu0 0.0
    %853 = vmatpush.msra.mxu0 %v814
    %854 = vmatpush.msra.mxu0 %v813
    %855 = vmatpush.msra.mxu0 %v812
    %856 = vmatpush.msra.mxu0 %v811
    %857 = vmatmul.f32.gmra.mxu0 %v837
    %v858 = vpop.f32.mrf.mxu0
    %v859 = vadd.f32 %v818, %v858
    %860 = vmatmul.f32.gmra.mxu0 %v839
    %v861 = vpop.f32.mrf.mxu0
    %v862 = vadd.f32 %v818, %v861
    %863 = vdwg.mxu0
    %v866 = vrot.slane %v859, 2
    %v867 = vrot.slane %v859, 4
    %v868 = vrot.slane %v859, 6
    %v869 = vrot.slane %v862, 2
    %v870 = vrot.slane %v862, 4
    %v871 = vrot.slane %v862, 6
    %878 = vst.msk [vmem:[#allocation4] sm:$0x3] %vm198, %v859
    %879 = vst.msk [vmem:[#allocation4 + $0x2] sm:$0x3] %vm198, %v866
    %880 = vst.msk [vmem:[#allocation4 + $0x4] sm:$0x3] %vm198, %v867
    %881 = vst.msk [vmem:[#allocation4 + $0x6] sm:$0x3] %vm198, %v868
    %882 = vst.msk [vmem:[#allocation4 + $0x8] sm:$0x3] %vm198, %v862
    %883 = vst.msk [vmem:[#allocation4 + $0xa] sm:$0x3] %vm198, %v869
    %884 = vst.msk [vmem:[#allocation4 + $0xc] sm:$0x3] %vm198, %v870
    %885 = vst.msk [vmem:[#allocation4 + $0xe] sm:$0x3] %vm198, %v871
    %s886 = scalar_lea.vmem [#allocation13], 192
    %v887 = vld [vmem:[%s886] sm:$0xff]
    %v888 = vld [vmem:[%s886 + $0x8] sm:$0xff]
    %v889 = vld [vmem:[%s886 + $0x10] sm:$0xff]
    %v890 = vld [vmem:[%s886 + $0x18] sm:$0xff]
    %s891 = scalar_lea.vmem %s7, 6
    %v892 = vld [vmem:[%s891] sm:$0x1]
    %v894 = vperm.slane %v892, 0
    %896 = vst [vmem:[#allocation1] ss:$4 sm:$0xff] %v718
    %s897 = scalar_lea.vmem [#allocation1], 1
    %898 = vst [vmem:[%s897] ss:$4 sm:$0xff] %v719
    %s899 = scalar_lea.vmem [#allocation1], 2
    %900 = vst [vmem:[%s899] ss:$4 sm:$0xff] %v720
    %s901 = scalar_lea.vmem [#allocation1], 3
    %902 = vst [vmem:[%s901] ss:$4 sm:$0xff] %v721
    %s903 = scalar_lea.vmem [#allocation1], 32
    %904 = vst [vmem:[%s903] ss:$4 sm:$0xff] %v722
    %s905 = scalar_lea.vmem [#allocation1], 33
    %906 = vst [vmem:[%s905] ss:$4 sm:$0xff] %v723
    %s907 = scalar_lea.vmem [#allocation1], 34
    %908 = vst [vmem:[%s907] ss:$4 sm:$0xff] %v724
    %s909 = scalar_lea.vmem [#allocation1], 35
    %910 = vst [vmem:[%s909] ss:$4 sm:$0xff] %v725
    %v911 = vld.sshfl [vmem:[#allocation1] sm:$0xff pattern:$0x73625140]
    %v912 = vld.sshfl [vmem:[#allocation1 + $0x20] sm:$0xff pattern:$0x73625140]
    %v913 = vsel %vm248, %v911, 0
    %v915 = vsel %vm248, %v912, 0
    %917 = vmatpush.msra.mxu0 0.0
    %918 = vmatpush.msra.mxu0 0.0
    %919 = vmatpush.msra.mxu0 0.0
    %920 = vmatpush.msra.mxu0 0.0
    %921 = vmatpush.msra.mxu0 0.0
    %922 = vmatpush.msra.mxu0 0.0
    %923 = vmatpush.msra.mxu0 0.0
    %924 = vmatpush.msra.mxu0 0.0
    %925 = vmatpush.msra.mxu0 0.0
    %926 = vmatpush.msra.mxu0 0.0
    %927 = vmatpush.msra.mxu0 0.0
    %928 = vmatpush.msra.mxu0 0.0
    %929 = vmatpush.msra.mxu0 %v890
    %930 = vmatpush.msra.mxu0 %v889
    %931 = vmatpush.msra.mxu0 %v888
    %932 = vmatpush.msra.mxu0 %v887
    %933 = vmatmul.f32.gmra.mxu0 %v913
    %v934 = vpop.f32.mrf.mxu0
    %v935 = vadd.f32 %v894, %v934
    %936 = vmatmul.f32.gmra.mxu0 %v915
    %v937 = vpop.f32.mrf.mxu0
    %v938 = vadd.f32 %v894, %v937
    %939 = vdwg.mxu0
    %v942 = vrot.slane %v935, 2
    %v943 = vrot.slane %v935, 4
    %v944 = vrot.slane %v935, 6
    %v945 = vrot.slane %v938, 2
    %v946 = vrot.slane %v938, 4
    %v947 = vrot.slane %v938, 6
    %954 = vst.msk [vmem:[#allocation5] sm:$0x3] %vm198, %v935
    %955 = vst.msk [vmem:[#allocation5 + $0x2] sm:$0x3] %vm198, %v942
    %956 = vst.msk [vmem:[#allocation5 + $0x4] sm:$0x3] %vm198, %v943
    %957 = vst.msk [vmem:[#allocation5 + $0x6] sm:$0x3] %vm198, %v944
    %958 = vst.msk [vmem:[#allocation5 + $0x8] sm:$0x3] %vm198, %v938
    %959 = vst.msk [vmem:[#allocation5 + $0xa] sm:$0x3] %vm198, %v945
    %960 = vst.msk [vmem:[#allocation5 + $0xc] sm:$0x3] %vm198, %v946
    %961 = vst.msk [vmem:[#allocation5 + $0xe] sm:$0x3] %vm198, %v947
    %s962 = scalar_lea.vmem [#allocation13], 224
    %v963 = vld [vmem:[%s962] sm:$0xff]
    %v964 = vld [vmem:[%s962 + $0x8] sm:$0xff]
    %v965 = vld [vmem:[%s962 + $0x10] sm:$0xff]
    %v966 = vld [vmem:[%s962 + $0x18] sm:$0xff]
    %s967 = scalar_lea.vmem %s7, 7
    %v968 = vld [vmem:[%s967] sm:$0x1]
    %v970 = vperm.slane %v968, 0
    %972 = vst [vmem:[#allocation1] ss:$4 sm:$0xff] %v718
    %s973 = scalar_lea.vmem [#allocation1], 1
    %974 = vst [vmem:[%s973] ss:$4 sm:$0xff] %v719
    %s975 = scalar_lea.vmem [#allocation1], 2
    %976 = vst [vmem:[%s975] ss:$4 sm:$0xff] %v720
    %s977 = scalar_lea.vmem [#allocation1], 3
    %978 = vst [vmem:[%s977] ss:$4 sm:$0xff] %v721
    %s979 = scalar_lea.vmem [#allocation1], 32
    %980 = vst [vmem:[%s979] ss:$4 sm:$0xff] %v722
    %s981 = scalar_lea.vmem [#allocation1], 33
    %982 = vst [vmem:[%s981] ss:$4 sm:$0xff] %v723
    %s983 = scalar_lea.vmem [#allocation1], 34
    %984 = vst [vmem:[%s983] ss:$4 sm:$0xff] %v724
    %s985 = scalar_lea.vmem [#allocation1], 35
    %986 = vst [vmem:[%s985] ss:$4 sm:$0xff] %v725
    %v987 = vld.sshfl [vmem:[#allocation1] sm:$0xff pattern:$0x73625140]
    %v988 = vld.sshfl [vmem:[#allocation1 + $0x20] sm:$0xff pattern:$0x73625140]
    %v989 = vsel %vm248, %v987, 0
    %v991 = vsel %vm248, %v988, 0
    %993 = vmatpush.msra.mxu0 0.0
    %994 = vmatpush.msra.mxu0 0.0
    %995 = vmatpush.msra.mxu0 0.0
    %996 = vmatpush.msra.mxu0 0.0
    %997 = vmatpush.msra.mxu0 0.0
    %998 = vmatpush.msra.mxu0 0.0
    %999 = vmatpush.msra.mxu0 0.0
    %1000 = vmatpush.msra.mxu0 0.0
    %1001 = vmatpush.msra.mxu0 0.0
    %1002 = vmatpush.msra.mxu0 0.0
    %1003 = vmatpush.msra.mxu0 0.0
    %1004 = vmatpush.msra.mxu0 0.0
    %1005 = vmatpush.msra.mxu0 %v966
    %1006 = vmatpush.msra.mxu0 %v965
    %1007 = vmatpush.msra.mxu0 %v964
    %1008 = vmatpush.msra.mxu0 %v963
    %1009 = vmatmul.f32.gmra.mxu0 %v989
    %v1010 = vpop.f32.mrf.mxu0
    %v1011 = vadd.f32 %v970, %v1010
    %1012 = vmatmul.f32.gmra.mxu0 %v991
    %v1013 = vpop.f32.mrf.mxu0
    %v1014 = vadd.f32 %v970, %v1013
    %1015 = vdwg.mxu0
    %v1018 = vrot.slane %v1011, 2
    %v1019 = vrot.slane %v1011, 4
    %v1020 = vrot.slane %v1011, 6
    %v1021 = vrot.slane %v1014, 2
    %v1022 = vrot.slane %v1014, 4
    %v1023 = vrot.slane %v1014, 6
    %1030 = vst.msk [vmem:[#allocation6] sm:$0x3] %vm198, %v1011
    %1031 = vst.msk [vmem:[#allocation6 + $0x2] sm:$0x3] %vm198, %v1018
    %1032 = vst.msk [vmem:[#allocation6 + $0x4] sm:$0x3] %vm198, %v1019
    %1033 = vst.msk [vmem:[#allocation6 + $0x6] sm:$0x3] %vm198, %v1020
    %1034 = vst.msk [vmem:[#allocation6 + $0x8] sm:$0x3] %vm198, %v1014
    %1035 = vst.msk [vmem:[#allocation6 + $0xa] sm:$0x3] %vm198, %v1021
    %1036 = vst.msk [vmem:[#allocation6 + $0xc] sm:$0x3] %vm198, %v1022
    %1037 = vst.msk [vmem:[#allocation6 + $0xe] sm:$0x3] %vm198, %v1023
    %s1038 = scalar_lea.vmem [#allocation14], 128
    %v1039 = vld [vmem:[%s1038] sm:$0xff]
    %v1040 = vld [vmem:[%s1038 + $0x8] sm:$0xff]
    %v1041 = vld [vmem:[%s1038 + $0x10] sm:$0xff]
    %v1042 = vld [vmem:[%s1038 + $0x18] sm:$0xff]
    %s1043 = scalar_lea.vmem [#allocation14], 160
    %v1044 = vld [vmem:[%s1043] sm:$0xff]
    %v1045 = vld [vmem:[%s1043 + $0x8] sm:$0xff]
    %v1046 = vld [vmem:[%s1043 + $0x10] sm:$0xff]
    %v1047 = vld [vmem:[%s1043 + $0x18] sm:$0xff]
    %s1048 = scalar_lea.vmem [#allocation14], 192
    %v1049 = vld [vmem:[%s1048] sm:$0xff]
    %v1050 = vld [vmem:[%s1048 + $0x8] sm:$0xff]
    %v1051 = vld [vmem:[%s1048 + $0x10] sm:$0xff]
    %v1052 = vld [vmem:[%s1048 + $0x18] sm:$0xff]
    %s1053 = scalar_lea.vmem [#allocation14], 224
    %v1054 = vld [vmem:[%s1053] sm:$0xff]
    %v1055 = vld [vmem:[%s1053 + $0x8] sm:$0xff]
    %v1056 = vld [vmem:[%s1053 + $0x10] sm:$0xff]
    %v1057 = vld [vmem:[%s1053 + $0x18] sm:$0xff]
    %s1058 = scalar_lea.vmem [#allocation7], 2
    %v1059 = vld [vmem:[%s1058] sm:$0x3]
    %s1060 = scalar_lea.vmem [#allocation8], 2
    %v1061 = vld [vmem:[%s1060] sm:$0x3]
    loop: start=0, step=1, limit=8
    $region69: #{tpu_custom_call.1} parent=1 // loop_pre_header
      _
    $region70: #{tpu_custom_call.1} parent=1 // loop_header
      %s1063 = sphi 0, %s1067
      %p1064 = scmp.ge.s32.totalorder %s1063, 8
      %v1068 = vphi %v1059, %v1228
      %v1069 = vphi %v1061, %v1226
    $region71: #{tpu_custom_call.1} parent=1 // loop_header_branch
      %1066 = sbr.rel (%p1064) target = $region75
    $region72: #{tpu_custom_call.1} parent=1 // loop_body
      %s1070 = smul.u32 %s1063, 2
      %s1071 = scalar_lea.vmem [#allocation3], %s1070
      %v1072 = vld [vmem:[%s1071] sm:$0x3]
      %v1074 = vsel %vm248, %v1068, 0
      %1076 = vmatpush.msra.mxu0 0.0
      %1077 = vmatpush.msra.mxu0 0.0
      %1078 = vmatpush.msra.mxu0 0.0
      %1079 = vmatpush.msra.mxu0 0.0
      %1080 = vmatpush.msra.mxu0 0.0
      %1081 = vmatpush.msra.mxu0 0.0
      %1082 = vmatpush.msra.mxu0 0.0
      %1083 = vmatpush.msra.mxu0 0.0
      %1084 = vmatpush.msra.mxu0 0.0
      %1085 = vmatpush.msra.mxu0 0.0
      %1086 = vmatpush.msra.mxu0 0.0
      %1087 = vmatpush.msra.mxu0 0.0
      %1088 = vmatpush.msra.mxu0 %v1042
      %1089 = vmatpush.msra.mxu0 %v1041
      %1090 = vmatpush.msra.mxu0 %v1040
      %1091 = vmatpush.msra.mxu0 %v1039
      %1092 = vmatmul.f32.gmra.mxu0 %v1074
      %v1093 = vpop.f32.mrf.mxu0
      %v1094 = vadd.f32 0.0, %v1093
      %1095 = vdwg.mxu0
      %v1096 = vadd.f32 %v1072, %v1094
      %v1097 = vxor.u32 %v1096, 2147483648
      %v1098 = vmul.f32 %v1097, 1.442695
      %v1099 = vpow.pop %v1098
      %v1100 = vadd.f32 %v1099, 1.0
      %v1101 = vrcp.pop %v1100
      %v1102 = vmul.f32 %v1100, %v1101
      %v1103 = vsub.f32 1.0, %v1102
      %v1104 = vmul.f32 %v1101, %v1103
      %v1105 = vadd.f32 %v1101, %v1104
      %vm1106 = vweird.f32 %v1100
      %vm1107 = vweird.f32 %v1101
      %vm1108 = vmor %vm1106, %vm1107
      %v1109 = vsel %vm1108, %v1101, %v1105
      %v1110 = vand.u32 2147483647, %v1100
      %vm1111 = vcmp.eq.f32.partialorder %v1110, 8.507059e+37
      %v1112 = vand.u32 %v1100, 2147483648
      %v1113 = vor.u32 1.1754944e-38, %v1112
      %v1114 = vsel %vm1111, %v1113, %v1109
      %v1115 = vmul.f32 1.0, %v1114
      %s1116 = scalar_lea.vmem [#allocation4], %s1070
      %v1117 = vld [vmem:[%s1116] sm:$0x3]
      %1118 = vmatpush.msra.mxu0 0.0
      %1119 = vmatpush.msra.mxu0 0.0
      %1120 = vmatpush.msra.mxu0 0.0
      %1121 = vmatpush.msra.mxu0 0.0
      %1122 = vmatpush.msra.mxu0 0.0
      %1123 = vmatpush.msra.mxu0 0.0
      %1124 = vmatpush.msra.mxu0 0.0
      %1125 = vmatpush.msra.mxu0 0.0
      %1126 = vmatpush.msra.mxu0 0.0
      %1127 = vmatpush.msra.mxu0 0.0
      %1128 = vmatpush.msra.mxu0 0.0
      %1129 = vmatpush.msra.mxu0 0.0
      %1130 = vmatpush.msra.mxu0 %v1047
      %1131 = vmatpush.msra.mxu0 %v1046
      %1132 = vmatpush.msra.mxu0 %v1045
      %1133 = vmatpush.msra.mxu0 %v1044
      %1134 = vmatmul.f32.gmra.mxu0 %v1074
      %v1135 = vpop.f32.mrf.mxu0
      %v1136 = vadd.f32 0.0, %v1135
      %1137 = vdwg.mxu0
      %v1138 = vadd.f32 %v1117, %v1136
      %v1139 = vxor.u32 %v1138, 2147483648
      %v1140 = vmul.f32 %v1139, 1.442695
      %v1141 = vpow.pop %v1140
      %v1142 = vadd.f32 %v1141, 1.0
      %v1143 = vrcp.pop %v1142
      %v1144 = vmul.f32 %v1142, %v1143
      %v1145 = vsub.f32 1.0, %v1144
      %v1146 = vmul.f32 %v1143, %v1145
      %v1147 = vadd.f32 %v1143, %v1146
      %vm1148 = vweird.f32 %v1142
      %vm1149 = vweird.f32 %v1143
      %vm1150 = vmor %vm1148, %vm1149
      %v1151 = vsel %vm1150, %v1143, %v1147
      %v1152 = vand.u32 2147483647, %v1142
      %vm1153 = vcmp.eq.f32.partialorder %v1152, 8.507059e+37
      %v1154 = vand.u32 %v1142, 2147483648
      %v1155 = vor.u32 1.1754944e-38, %v1154
      %v1156 = vsel %vm1153, %v1155, %v1151
      %v1157 = vmul.f32 1.0, %v1156
      %s1158 = scalar_lea.vmem [#allocation5], %s1070
      %v1159 = vld [vmem:[%s1158] sm:$0x3]
      %1160 = vmatpush.msra.mxu0 0.0
      %1161 = vmatpush.msra.mxu0 0.0
      %1162 = vmatpush.msra.mxu0 0.0
      %1163 = vmatpush.msra.mxu0 0.0
      %1164 = vmatpush.msra.mxu0 0.0
      %1165 = vmatpush.msra.mxu0 0.0
      %1166 = vmatpush.msra.mxu0 0.0
      %1167 = vmatpush.msra.mxu0 0.0
      %1168 = vmatpush.msra.mxu0 0.0
      %1169 = vmatpush.msra.mxu0 0.0
      %1170 = vmatpush.msra.mxu0 0.0
      %1171 = vmatpush.msra.mxu0 0.0
      %1172 = vmatpush.msra.mxu0 %v1052
      %1173 = vmatpush.msra.mxu0 %v1051
      %1174 = vmatpush.msra.mxu0 %v1050
      %1175 = vmatpush.msra.mxu0 %v1049
      %1176 = vmatmul.f32.gmra.mxu0 %v1074
      %v1177 = vpop.f32.mrf.mxu0
      %v1178 = vadd.f32 0.0, %v1177
      %1179 = vdwg.mxu0
      %v1180 = vadd.f32 %v1159, %v1178
      %v1181 = vtanh.pop %v1180
      %s1182 = scalar_lea.vmem [#allocation6], %s1070
      %v1183 = vld [vmem:[%s1182] sm:$0x3]
      %1184 = vmatpush.msra.mxu0 0.0
      %1185 = vmatpush.msra.mxu0 0.0
      %1186 = vmatpush.msra.mxu0 0.0
      %1187 = vmatpush.msra.mxu0 0.0
      %1188 = vmatpush.msra.mxu0 0.0
      %1189 = vmatpush.msra.mxu0 0.0
      %1190 = vmatpush.msra.mxu0 0.0
      %1191 = vmatpush.msra.mxu0 0.0
      %1192 = vmatpush.msra.mxu0 0.0
      %1193 = vmatpush.msra.mxu0 0.0
      %1194 = vmatpush.msra.mxu0 0.0
      %1195 = vmatpush.msra.mxu0 0.0
      %1196 = vmatpush.msra.mxu0 %v1057
      %1197 = vmatpush.msra.mxu0 %v1056
      %1198 = vmatpush.msra.mxu0 %v1055
      %1199 = vmatpush.msra.mxu0 %v1054
      %1200 = vmatmul.f32.gmra.mxu0 %v1074
      %v1201 = vpop.f32.mrf.mxu0
      %v1202 = vadd.f32 0.0, %v1201
      %1203 = vdwg.mxu0
      %v1204 = vadd.f32 %v1183, %v1202
      %v1205 = vxor.u32 %v1204, 2147483648
      %v1206 = vmul.f32 %v1205, 1.442695
      %v1207 = vpow.pop %v1206
      %v1208 = vadd.f32 %v1207, 1.0
      %v1209 = vrcp.pop %v1208
      %v1210 = vmul.f32 %v1208, %v1209
      %v1211 = vsub.f32 1.0, %v1210
      %v1212 = vmul.f32 %v1209, %v1211
      %v1213 = vadd.f32 %v1209, %v1212
      %vm1214 = vweird.f32 %v1208
      %vm1215 = vweird.f32 %v1209
      %vm1216 = vmor %vm1214, %vm1215
      %v1217 = vsel %vm1216, %v1209, %v1213
      %v1218 = vand.u32 2147483647, %v1208
      %vm1219 = vcmp.eq.f32.partialorder %v1218, 8.507059e+37
      %v1220 = vand.u32 %v1208, 2147483648
      %v1221 = vor.u32 1.1754944e-38, %v1220
      %v1222 = vsel %vm1219, %v1221, %v1217
      %v1223 = vmul.f32 1.0, %v1222
      %v1224 = vmul.f32 %v1157, %v1069
      %v1225 = vmul.f32 %v1115, %v1181
      %v1226 = vadd.f32 %v1224, %v1225
      %v1227 = vtanh.pop %v1226
      %v1228 = vmul.f32 %v1223, %v1227
      %s1229 = scalar_lea.vmem [#allocation2], %s1070
      %1230 = vst.msk [vmem:[%s1229] sm:$0x3] %vm198, %v1228
    $region73: #{tpu_custom_call.1} parent=1 // loop_footer
      %s1067 = sadd.s32 1, %s1063
    $region74: #{tpu_custom_call.1} parent=1 // loop_footer_branch
      %1062 = sbr.rel target = $region70
    $region75: #{tpu_custom_call.1} parent=1 // loop_exit
      _
    %1231 = vst.msk [vmem:[%s1058] sm:$0x3] %vm198, %v1068
    %1232 = vst.msk [vmem:[%s1060] sm:$0x3] %vm198, %v1069
    %v1233 = vld [vmem:[#allocation2] sm:$0x3]
    %v1234 = vld [vmem:[#allocation2 + $0x2] sm:$0x3]
    %v1235 = vld [vmem:[#allocation2 + $0x4] sm:$0x3]
    %v1236 = vld [vmem:[#allocation2 + $0x6] sm:$0x3]
    %v1237 = vld [vmem:[#allocation2 + $0x8] sm:$0x3]
    %v1238 = vld [vmem:[#allocation2 + $0xa] sm:$0x3]
    %v1239 = vld [vmem:[#allocation2 + $0xc] sm:$0x3]
    %v1240 = vld [vmem:[#allocation2 + $0xe] sm:$0x3]
    %v1241 = vld [vmem:[%s8] sm:$0xff]
    %v1242 = vld [vmem:[%s8 + $0x8] sm:$0xff]
    %v1243 = vld [vmem:[%s8 + $0x10] sm:$0xff]
    %v1244 = vld [vmem:[%s8 + $0x18] sm:$0xff]
    %v1245 = vld [vmem:[%s9] sm:$0x1]
    %v1247 = vperm.slane %v1245, 0
    %1257 = vst [vmem:[#allocation1] ss:$4 sm:$0xff] %v1233
    %s1258 = scalar_lea.vmem [#allocation1], 1
    %1259 = vst [vmem:[%s1258] ss:$4 sm:$0xff] %v1234
    %s1260 = scalar_lea.vmem [#allocation1], 2
    %1261 = vst [vmem:[%s1260] ss:$4 sm:$0xff] %v1235
    %s1262 = scalar_lea.vmem [#allocation1], 3
    %1263 = vst [vmem:[%s1262] ss:$4 sm:$0xff] %v1236
    %s1264 = scalar_lea.vmem [#allocation1], 32
    %1265 = vst [vmem:[%s1264] ss:$4 sm:$0xff] %v1237
    %s1266 = scalar_lea.vmem [#allocation1], 33
    %1267 = vst [vmem:[%s1266] ss:$4 sm:$0xff] %v1238
    %s1268 = scalar_lea.vmem [#allocation1], 34
    %1269 = vst [vmem:[%s1268] ss:$4 sm:$0xff] %v1239
    %s1270 = scalar_lea.vmem [#allocation1], 35
    %1271 = vst [vmem:[%s1270] ss:$4 sm:$0xff] %v1240
    %v1272 = vld.sshfl [vmem:[#allocation1] sm:$0xff pattern:$0x73625140]
    %v1273 = vld.sshfl [vmem:[#allocation1 + $0x20] sm:$0xff pattern:$0x73625140]
    %v1274 = vsel %vm248, %v1272, 0
    %v1276 = vsel %vm248, %v1273, 0
    %1278 = vmatpush.msra.mxu0 0.0
    %1279 = vmatpush.msra.mxu0 0.0
    %1280 = vmatpush.msra.mxu0 0.0
    %1281 = vmatpush.msra.mxu0 0.0
    %1282 = vmatpush.msra.mxu0 0.0
    %1283 = vmatpush.msra.mxu0 0.0
    %1284 = vmatpush.msra.mxu0 0.0
    %1285 = vmatpush.msra.mxu0 0.0
    %1286 = vmatpush.msra.mxu0 0.0
    %1287 = vmatpush.msra.mxu0 0.0
    %1288 = vmatpush.msra.mxu0 0.0
    %1289 = vmatpush.msra.mxu0 0.0
    %1290 = vmatpush.msra.mxu0 %v1244
    %1291 = vmatpush.msra.mxu0 %v1243
    %1292 = vmatpush.msra.mxu0 %v1242
    %1293 = vmatpush.msra.mxu0 %v1241
    %1294 = vmatmul.f32.gmra.mxu0 %v1274
    %v1295 = vpop.f32.mrf.mxu0
    %v1296 = vadd.f32 %v1247, %v1295
    %1297 = vmatmul.f32.gmra.mxu0 %v1276
    %v1298 = vpop.f32.mrf.mxu0
    %v1299 = vadd.f32 %v1247, %v1298
    %1300 = vdwg.mxu0
    %v1303 = vrot.slane %v1296, 2
    %v1304 = vrot.slane %v1296, 4
    %v1305 = vrot.slane %v1296, 6
    %v1306 = vrot.slane %v1299, 2
    %v1307 = vrot.slane %v1299, 4
    %v1308 = vrot.slane %v1299, 6
    %vm1315 = vcmask 41984
    %1316 = vst.msk [vmem:[%s10] sm:$0x3] %vm1315, %v1296
    %1317 = vst.msk [vmem:[%s10 + $0x2] sm:$0x3] %vm1315, %v1303
    %1318 = vst.msk [vmem:[%s10 + $0x4] sm:$0x3] %vm1315, %v1304
    %1319 = vst.msk [vmem:[%s10 + $0x6] sm:$0x3] %vm1315, %v1305
    %1320 = vst.msk [vmem:[%s10 + $0x8] sm:$0x3] %vm1315, %v1299
    %1321 = vst.msk [vmem:[%s10 + $0xa] sm:$0x3] %vm1315, %v1306
    %1322 = vst.msk [vmem:[%s10 + $0xc] sm:$0x3] %vm1315, %v1307
    %1323 = vst.msk [vmem:[%s10 + $0xe] sm:$0x3] %vm1315, %v1308
    // Predicated region
    $region76: #{tpu_custom_call.1} parent=1 // pred_check
      _
    $region77: #{tpu_custom_call.1} parent=1 // pred_check_branch
      %1325 = sbr.rel (0) target = $region79
    $region78: #{tpu_custom_call.1} parent=1 // pred_region
      _
    $region79: #{tpu_custom_call.1} parent=1 // pred_fallthru
      _
    // Predicated region
    $region80: #{tpu_custom_call.1} parent=1 // pred_check
      _
    $region81: #{tpu_custom_call.1} parent=1 // pred_check_branch
      %1327 = sbr.rel (0) target = $region83
    $region82: #{tpu_custom_call.1} parent=1 // pred_region
      _
    $region83: #{tpu_custom_call.1} parent=1 // pred_fallthru
      _
    %1328 = vsyncpa [#allocation10], 1
    %1329 = vsyncpa [#allocation12], 1
    %1330 = vsyncpa [#allocation15], 1

</llo_original>
